<compile_context>
chip_gen: v7x
topology: tpu7x:2x2x1
jax: 0.10.0
libtpu: 0.0.40
codegen_flags: <defaults>
</compile_context>

<pallas_src>
import functools

import jax
import jax.numpy as jnp
from jax.experimental import pallas as pl
from jax.experimental.pallas import tpu as pltpu

WIN_SIZES = (2, 3, 4)
FILTERS_PER_WIN = 25                                      # out_channels = w * 25
CONV_OUT_DIM = sum(WIN_SIZES) * FILTERS_PER_WIN           # 225
FUSED_CONV_DIM = 256                                      # 225 padded to 2x128 lanes


def _round_up(x, m):
    return (x + m - 1) // m * m


def _char_embed_kernel(x_ref, wf_ref, bf_ref, wgt_ref, bgt_ref, o_ref,
                       *, n_pos, hidden_pad):
    """One N-tile: running max over n_pos identical full-width conv GEMMs
    (ReLU + AdaptiveMaxPool1d fused), then the fused highway projection."""
    x = x_ref[...]                                          # (tn, K_pad), lane-dense
    conv_out = None
    for l in range(n_pos):                                  # n_pos identical bodies
        # Pre-shifted weight slab: full-width, lane-aligned LHS, no runtime mask.
        y = jnp.dot(x, wf_ref[l], preferred_element_type=jnp.float32) + bf_ref[l]
        y = jnp.maximum(y, 0.0)                             # ReLU, f32
        conv_out = y if conv_out is None else jnp.maximum(conv_out, y)

    # Highway: fused gate|trans projection (256 -> 2*HP); halves 128-aligned.
    z = jnp.dot(conv_out.astype(wgt_ref.dtype), wgt_ref[...],
                preferred_element_type=jnp.float32) + bgt_ref[...]
    gate = jax.nn.sigmoid(z[:, :hidden_pad])
    trans = jnp.maximum(z[:, hidden_pad:], 0.0)
    # Carry slice is lane-aligned (HP wide); lanes >= H hold discarded values.
    o_ref[...] = gate * trans + (1.0 - gate) * conv_out[:, :hidden_pad]


def _pack_fused_params(params, embed_dim, hidden, seq_len, dtype):
    """Pack per-branch conv / highway weights into fused, lane-aligned slabs.

    wf: (L+1, K_pad, 256)  per-position pre-shifted conv weight (taps at rows
        (l+t-1)*C; zero rows for padding taps / padded K; zero columns for
        positions a branch does not produce and for channels 225..255).
    bf: (L+1, 1, 256)      matching per-position bias (zero where masked).
    wgt:(256, 2*HP)        gate in lanes [0:HP], trans in [HP:2HP].
    bgt:(1, 2*HP)
    """
    c, h, L = embed_dim, hidden, seq_len
    n_pos = L + 1
    k_pad = _round_up(L * c, 128)
    hp = _round_up(h, 128)

    wf = jnp.zeros((n_pos, k_pad, FUSED_CONV_DIM), jnp.float32)
    bf = jnp.zeros((n_pos, 1, FUSED_CONV_DIM), jnp.float32)
    for l in range(n_pos):
        off = 0
        for w in WIN_SIZES:
            n_out = w * FILTERS_PER_WIN
            if l < L + 3 - w:                       # branch produces position l
                for t in range(w):
                    i = l + t - 1                   # Conv1d padding=1
                    if 0 <= i < L:                  # padding taps stay zero
                        wf = wf.at[l, i * c:(i + 1) * c, off:off + n_out].set(
                            params[f"w{w}"][t * c:(t + 1) * c, :])
                bf = bf.at[l, 0, off:off + n_out].set(params[f"b{w}"][0])
            off += n_out                            # masked position: all zero

    wgt = jnp.zeros((FUSED_CONV_DIM, 2 * hp), jnp.float32)
    wgt = wgt.at[:CONV_OUT_DIM, :h].set(params["wg"])
    wgt = wgt.at[:CONV_OUT_DIM, hp:hp + h].set(params["wt"])
    bgt = jnp.zeros((1, 2 * hp), jnp.float32)
    bgt = bgt.at[:, :h].set(params["bg"])
    bgt = bgt.at[:, hp:hp + h].set(params["bt"])
    return wf.astype(dtype), bf, wgt.astype(dtype), bgt


def char_embed_forward(chars, params, *, char_hidden_size,
                       block_rows=None, compute_dtype=jnp.bfloat16):
    """chars: (B, W, L) int32 -> (B, W, char_hidden_size) float32."""
    b, wseq, l = chars.shape
    n = b * wseq
    emb = params["embedding"]
    c = emb.shape[1]
    h = char_hidden_size
    assert h <= CONV_OUT_DIM, "carry path needs char_hidden_size <= 225"
    assert l >= 2, "char_seq_len must be >= 2 for the k=4 conv with padding=1"

    wf, bf, wgt, bgt = _pack_fused_params(params, c, h, l, compute_dtype)
    n_pos = l + 1
    k_pad = wf.shape[1]
    hp = _round_up(h, 128)

    # Embedding gather (glue), directly in compute_dtype (bf16 default).
    x = jnp.take(emb.astype(compute_dtype), chars.reshape(n, l), axis=0)
    x_flat = x.reshape(n, l * c)
    if k_pad != l * c:                              # lane-dense feature dim
        x_flat = jnp.pad(x_flat, ((0, 0), (0, k_pad - l * c)))

    # N tiling: >= 8 grid steps (>= 4 per TC on v7x megacore) but tiles kept
    # >= 256 rows so the per-position weight re-stage hides under streaming.
    if block_rows is None:
        block_rows = min(1024, max(256, _round_up(pl.cdiv(n, 8), 16)))
    tn = max(16, (block_rows // 16) * 16)
    tn = min(tn, _round_up(n, 16))
    n_pad = _round_up(n, tn)
    if n_pad != n:
        x_flat = jnp.pad(x_flat, ((0, n_pad - n), (0, 0)))
    grid = (n_pad // tn,)

    kernel = functools.partial(_char_embed_kernel, n_pos=n_pos, hidden_pad=hp)

    out = pl.pallas_call(
        kernel,
        out_shape=jax.ShapeDtypeStruct((n_pad, hp), jnp.float32),
        grid_spec=pltpu.PrefetchScalarGridSpec(
            num_scalar_prefetch=0,
            grid=grid,
            in_specs=[
                pl.BlockSpec((tn, k_pad), lambda i: (i, 0)),    # x tile
                pl.BlockSpec(wf.shape, lambda i: (0, 0, 0)),    # pre-shifted conv W
                pl.BlockSpec(bf.shape, lambda i: (0, 0, 0)),    # per-position conv b
                pl.BlockSpec(wgt.shape, lambda i: (0, 0)),      # gate|trans W
                pl.BlockSpec(bgt.shape, lambda i: (0, 0)),      # gate|trans b
            ],
            out_specs=pl.BlockSpec((tn, hp), lambda i: (i, 0)),
        ),
        compiler_params=pltpu.CompilerParams(
            dimension_semantics=("parallel",),
            vmem_limit_bytes=32 * 1024 * 1024,
        ),
    )(x_flat, wf, bf, wgt, bgt)

    return out[:n, :h].reshape(b, wseq, h)


def init_params(key, char_vocab_size, char_embedding_dim, char_hidden_size):
    keys = jax.random.split(key, 10)

    # Embedding: xavier_uniform with relu gain, row 0 zero (padding_idx=0).
    gain = jnp.sqrt(2.0)
    bound = gain * jnp.sqrt(6.0 / (char_vocab_size + char_embedding_dim))
    emb = jax.random.uniform(keys[0], (char_vocab_size, char_embedding_dim),
                             jnp.float32, -bound, bound)
    emb = emb.at[0].set(0.0)

    params = {"embedding": emb}

    # Conv1d weights: PyTorch shape (C_out, C_in, w); stored unfolded as
    # (w*C_in, C_out) with row t*C_in + c == W[o, c, t].
    for idx, w in enumerate(WIN_SIZES):
        c_out = w * FILTERS_PER_WIN
        w_pt = jax.random.uniform(keys[1 + idx], (c_out, char_embedding_dim, w),
                                  jnp.float32, -0.1, 0.1)
        params[f"w{w}"] = jnp.transpose(w_pt, (2, 1, 0)).reshape(
            w * char_embedding_dim, c_out)
        params[f"b{w}"] = jax.random.uniform(keys[4 + idx], (1, c_out),
                                             jnp.float32, -0.1, 0.1)

    # Linears stored as (in, out) so the kernel does x @ W + b.
    params["wg"] = jax.random.uniform(keys[7], (CONV_OUT_DIM, char_hidden_size),
                                      jnp.float32, -0.1, 0.1)
    params["bg"] = jnp.full((1, char_hidden_size), -2.0, jnp.float32)  # bias=-2
    params["wt"] = jax.random.uniform(keys[8], (CONV_OUT_DIM, char_hidden_size),
                                      jnp.float32, -0.1, 0.1)
    params["bt"] = jax.random.uniform(keys[9], (1, char_hidden_size),
                                      jnp.float32, -0.1, 0.1)
    # TODO(synk): self.linear exists in __init__ but is never used in forward; omitted.
    return params


def _reference_forward(chars, params, *, char_hidden_size):
    """Pure-JAX f32 reference of the PyTorch forward (eval mode)."""
    b, wseq, l = chars.shape
    n = b * wseq
    x = jnp.take(params["embedding"], chars.reshape(n, l), axis=0)
    x_pad = jnp.pad(x, ((0, 0), (1, 1), (0, 0)))
    feats = []
    for w in WIN_SIZES:
        l_out = l + 3 - w
        windows = jnp.concatenate([x_pad[:, t:t + l_out, :] for t in range(w)],
                                  axis=-1)
        y = jnp.einsum("nlk,ko->nlo", windows, params[f"w{w}"]) + params[f"b{w}"]
        feats.append(jnp.max(jnp.maximum(y, 0.0), axis=1))
    conv_out = jnp.concatenate(feats, axis=-1)
    gate = jax.nn.sigmoid(conv_out @ params["wg"] + params["bg"])
    trans = conv_out @ params["wt"] + params["bt"]
    out = gate * jnp.maximum(trans, 0.0) + (1.0 - gate) * conv_out[:, :char_hidden_size]
    return out.reshape(b, wseq, char_hidden_size)


if __name__ == "__main__":
    CHAR_VOCAB = 50
    CHAR_EMBED_DIM = 16
    CHAR_HIDDEN = 32
    B, WSEQ, LCHAR = 2, 16, 8          # N = 32 rows

    key = jax.random.PRNGKey(0)
    pkey, ikey = jax.random.split(key)
    params = init_params(pkey, CHAR_VOCAB, CHAR_EMBED_DIM, CHAR_HIDDEN)
    chars = jax.random.randint(ikey, (B, WSEQ, LCHAR), 0, CHAR_VOCAB,
                               dtype=jnp.int32)

    ref = _reference_forward(chars, params, char_hidden_size=CHAR_HIDDEN)

    # f32 path with explicit small tile (exercises multi-step grid / tiling).
    out_f32 = char_embed_forward(chars, params, char_hidden_size=CHAR_HIDDEN,
                                 block_rows=16, compute_dtype=jnp.float32)
    out_f32 = jax.block_until_ready(out_f32)
    assert out_f32.shape == (B, WSEQ, CHAR_HIDDEN)
    assert jnp.allclose(out_f32, ref, atol=2e-3, rtol=2e-3), \
        float(jnp.max(jnp.abs(out_f32 - ref)))

    # bf16 default path with default tile selection (halved activation traffic,
    # bf16 MXU, f32 accumulation) — looser tolerance vs the f32 reference.
    out_bf16 = char_embed_forward(chars, params, char_hidden_size=CHAR_HIDDEN,
                                  compute_dtype=jnp.bfloat16)
    out_bf16 = jax.block_until_ready(out_bf16)
    assert out_bf16.shape == (B, WSEQ, CHAR_HIDDEN)
    assert jnp.allclose(out_bf16, ref, atol=2e-2, rtol=2e-2), \
        float(jnp.max(jnp.abs(out_bf16 - ref)))

    print("KERNEL_OK")
</pallas_src>

<mosaic_0001>
module attributes {stable_mosaic.version = 11 : i64} {
  func.func @_char_embed_kernel(%arg0: i32, %arg1: memref<16x128xf32, #tpu.memory_space<vmem>>, %arg2: memref<9x128x256xf32, #tpu.memory_space<vmem>>, %arg3: memref<9x1x256xf32, #tpu.memory_space<vmem>>, %arg4: memref<256x256xf32, #tpu.memory_space<vmem>>, %arg5: memref<1x256xf32, #tpu.memory_space<vmem>>, %arg6: memref<16x128xf32, #tpu.memory_space<vmem>>) attributes {dimension_semantics = [#tpu.dimension_semantics<parallel>], iteration_bounds = array<i64: 2>, scalar_prefetch = 0 : i64, scratch_operands = 0 : i64, tpu.core_type = #tpu.core_type<tc>, window_params = [{transform_indices = @transform_0, window_bounds = array<i64: 16, 128>}, {pipeline_mode = #tpu.pipeline_mode<synchronous>, transform_indices = @transform_1, window_bounds = array<i64: 9, 128, 256>}, {pipeline_mode = #tpu.pipeline_mode<synchronous>, transform_indices = @transform_2, window_bounds = array<i64: 9, 1, 256>}, {pipeline_mode = #tpu.pipeline_mode<synchronous>, transform_indices = @transform_3, window_bounds = array<i64: 256, 256>}, {pipeline_mode = #tpu.pipeline_mode<synchronous>, transform_indices = @transform_4, window_bounds = array<i64: 1, 256>}, {transform_indices = @transform_5, window_bounds = array<i64: 16, 128>}]} {
    %c0 = arith.constant 0 : index
    %c0_0 = arith.constant 0 : index
    %0 = vector.load %arg1[%c0, %c0_0] : memref<16x128xf32, #tpu.memory_space<vmem>>, vector<16x128xf32>
    %c0_1 = arith.constant 0 : index
    %c0_2 = arith.constant 0 : index
    %c0_3 = arith.constant 0 : index
    %1 = vector.load %arg2[%c0_1, %c0_2, %c0_3] : memref<9x128x256xf32, #tpu.memory_space<vmem>>, vector<1x128x256xf32>
    %2 = vector.shape_cast %1 : vector<1x128x256xf32> to vector<128x256xf32>
    %cst = arith.constant dense<0.000000e+00> : vector<16x256xf32>
    %3 = tpu.matmul %0, %2, %cst {dimension_numbers = #tpu.dot_dimension_numbers<[1], [0], [0], [1], [0, 0, 1, 1], [], []>} : vector<16x128xf32>, vector<128x256xf32>, vector<16x256xf32> -> vector<16x256xf32>
    %c0_4 = arith.constant 0 : index
    %c0_5 = arith.constant 0 : index
    %c0_6 = arith.constant 0 : index
    %4 = vector.load %arg3[%c0_4, %c0_5, %c0_6] : memref<9x1x256xf32, #tpu.memory_space<vmem>>, vector<1x1x256xf32>
    %5 = vector.shape_cast %4 : vector<1x1x256xf32> to vector<1x256xf32>
    %6 = vector.broadcast %5 : vector<1x256xf32> to vector<16x256xf32>
    %7 = arith.addf %3, %6 : vector<16x256xf32>
    %cst_7 = arith.constant 0.000000e+00 : f32
    %8 = vector.broadcast %cst_7 : f32 to vector<16x256xf32>
    %9 = arith.maximumf %7, %8 : vector<16x256xf32>
    %c1 = arith.constant 1 : index
    %c0_8 = arith.constant 0 : index
    %c0_9 = arith.constant 0 : index
    %10 = vector.load %arg2[%c1, %c0_8, %c0_9] : memref<9x128x256xf32, #tpu.memory_space<vmem>>, vector<1x128x256xf32>
    %11 = vector.shape_cast %10 : vector<1x128x256xf32> to vector<128x256xf32>
    %cst_10 = arith.constant dense<0.000000e+00> : vector<16x256xf32>
    %12 = tpu.matmul %0, %11, %cst_10 {dimension_numbers = #tpu.dot_dimension_numbers<[1], [0], [0], [1], [0, 0, 1, 1], [], []>} : vector<16x128xf32>, vector<128x256xf32>, vector<16x256xf32> -> vector<16x256xf32>
    %c1_11 = arith.constant 1 : index
    %c0_12 = arith.constant 0 : index
    %c0_13 = arith.constant 0 : index
    %13 = vector.load %arg3[%c1_11, %c0_12, %c0_13] : memref<9x1x256xf32, #tpu.memory_space<vmem>>, vector<1x1x256xf32>
    %14 = vector.shape_cast %13 : vector<1x1x256xf32> to vector<1x256xf32>
    %15 = vector.broadcast %14 : vector<1x256xf32> to vector<16x256xf32>
    %16 = arith.addf %12, %15 : vector<16x256xf32>
    %cst_14 = arith.constant 0.000000e+00 : f32
    %17 = vector.broadcast %cst_14 : f32 to vector<16x256xf32>
    %18 = arith.maximumf %16, %17 : vector<16x256xf32>
    %19 = arith.maximumf %9, %18 : vector<16x256xf32>
    %c2 = arith.constant 2 : index
    %c0_15 = arith.constant 0 : index
    %c0_16 = arith.constant 0 : index
    %20 = vector.load %arg2[%c2, %c0_15, %c0_16] : memref<9x128x256xf32, #tpu.memory_space<vmem>>, vector<1x128x256xf32>
    %21 = vector.shape_cast %20 : vector<1x128x256xf32> to vector<128x256xf32>
    %cst_17 = arith.constant dense<0.000000e+00> : vector<16x256xf32>
    %22 = tpu.matmul %0, %21, %cst_17 {dimension_numbers = #tpu.dot_dimension_numbers<[1], [0], [0], [1], [0, 0, 1, 1], [], []>} : vector<16x128xf32>, vector<128x256xf32>, vector<16x256xf32> -> vector<16x256xf32>
    %c2_18 = arith.constant 2 : index
    %c0_19 = arith.constant 0 : index
    %c0_20 = arith.constant 0 : index
    %23 = vector.load %arg3[%c2_18, %c0_19, %c0_20] : memref<9x1x256xf32, #tpu.memory_space<vmem>>, vector<1x1x256xf32>
    %24 = vector.shape_cast %23 : vector<1x1x256xf32> to vector<1x256xf32>
    %25 = vector.broadcast %24 : vector<1x256xf32> to vector<16x256xf32>
    %26 = arith.addf %22, %25 : vector<16x256xf32>
    %cst_21 = arith.constant 0.000000e+00 : f32
    %27 = vector.broadcast %cst_21 : f32 to vector<16x256xf32>
    %28 = arith.maximumf %26, %27 : vector<16x256xf32>
    %29 = arith.maximumf %19, %28 : vector<16x256xf32>
    %c3 = arith.constant 3 : index
    %c0_22 = arith.constant 0 : index
    %c0_23 = arith.constant 0 : index
    %30 = vector.load %arg2[%c3, %c0_22, %c0_23] : memref<9x128x256xf32, #tpu.memory_space<vmem>>, vector<1x128x256xf32>
    %31 = vector.shape_cast %30 : vector<1x128x256xf32> to vector<128x256xf32>
    %cst_24 = arith.constant dense<0.000000e+00> : vector<16x256xf32>
    %32 = tpu.matmul %0, %31, %cst_24 {dimension_numbers = #tpu.dot_dimension_numbers<[1], [0], [0], [1], [0, 0, 1, 1], [], []>} : vector<16x128xf32>, vector<128x256xf32>, vector<16x256xf32> -> vector<16x256xf32>
    %c3_25 = arith.constant 3 : index
    %c0_26 = arith.constant 0 : index
    %c0_27 = arith.constant 0 : index
    %33 = vector.load %arg3[%c3_25, %c0_26, %c0_27] : memref<9x1x256xf32, #tpu.memory_space<vmem>>, vector<1x1x256xf32>
    %34 = vector.shape_cast %33 : vector<1x1x256xf32> to vector<1x256xf32>
    %35 = vector.broadcast %34 : vector<1x256xf32> to vector<16x256xf32>
    %36 = arith.addf %32, %35 : vector<16x256xf32>
    %cst_28 = arith.constant 0.000000e+00 : f32
    %37 = vector.broadcast %cst_28 : f32 to vector<16x256xf32>
    %38 = arith.maximumf %36, %37 : vector<16x256xf32>
    %39 = arith.maximumf %29, %38 : vector<16x256xf32>
    %c4 = arith.constant 4 : index
    %c0_29 = arith.constant 0 : index
    %c0_30 = arith.constant 0 : index
    %40 = vector.load %arg2[%c4, %c0_29, %c0_30] : memref<9x128x256xf32, #tpu.memory_space<vmem>>, vector<1x128x256xf32>
    %41 = vector.shape_cast %40 : vector<1x128x256xf32> to vector<128x256xf32>
    %cst_31 = arith.constant dense<0.000000e+00> : vector<16x256xf32>
    %42 = tpu.matmul %0, %41, %cst_31 {dimension_numbers = #tpu.dot_dimension_numbers<[1], [0], [0], [1], [0, 0, 1, 1], [], []>} : vector<16x128xf32>, vector<128x256xf32>, vector<16x256xf32> -> vector<16x256xf32>
    %c4_32 = arith.constant 4 : index
    %c0_33 = arith.constant 0 : index
    %c0_34 = arith.constant 0 : index
    %43 = vector.load %arg3[%c4_32, %c0_33, %c0_34] : memref<9x1x256xf32, #tpu.memory_space<vmem>>, vector<1x1x256xf32>
    %44 = vector.shape_cast %43 : vector<1x1x256xf32> to vector<1x256xf32>
    %45 = vector.broadcast %44 : vector<1x256xf32> to vector<16x256xf32>
    %46 = arith.addf %42, %45 : vector<16x256xf32>
    %cst_35 = arith.constant 0.000000e+00 : f32
    %47 = vector.broadcast %cst_35 : f32 to vector<16x256xf32>
    %48 = arith.maximumf %46, %47 : vector<16x256xf32>
    %49 = arith.maximumf %39, %48 : vector<16x256xf32>
    %c5 = arith.constant 5 : index
    %c0_36 = arith.constant 0 : index
    %c0_37 = arith.constant 0 : index
    %50 = vector.load %arg2[%c5, %c0_36, %c0_37] : memref<9x128x256xf32, #tpu.memory_space<vmem>>, vector<1x128x256xf32>
    %51 = vector.shape_cast %50 : vector<1x128x256xf32> to vector<128x256xf32>
    %cst_38 = arith.constant dense<0.000000e+00> : vector<16x256xf32>
    %52 = tpu.matmul %0, %51, %cst_38 {dimension_numbers = #tpu.dot_dimension_numbers<[1], [0], [0], [1], [0, 0, 1, 1], [], []>} : vector<16x128xf32>, vector<128x256xf32>, vector<16x256xf32> -> vector<16x256xf32>
    %c5_39 = arith.constant 5 : index
    %c0_40 = arith.constant 0 : index
    %c0_41 = arith.constant 0 : index
    %53 = vector.load %arg3[%c5_39, %c0_40, %c0_41] : memref<9x1x256xf32, #tpu.memory_space<vmem>>, vector<1x1x256xf32>
    %54 = vector.shape_cast %53 : vector<1x1x256xf32> to vector<1x256xf32>
    %55 = vector.broadcast %54 : vector<1x256xf32> to vector<16x256xf32>
    %56 = arith.addf %52, %55 : vector<16x256xf32>
    %cst_42 = arith.constant 0.000000e+00 : f32
    %57 = vector.broadcast %cst_42 : f32 to vector<16x256xf32>
    %58 = arith.maximumf %56, %57 : vector<16x256xf32>
    %59 = arith.maximumf %49, %58 : vector<16x256xf32>
    %c6 = arith.constant 6 : index
    %c0_43 = arith.constant 0 : index
    %c0_44 = arith.constant 0 : index
    %60 = vector.load %arg2[%c6, %c0_43, %c0_44] : memref<9x128x256xf32, #tpu.memory_space<vmem>>, vector<1x128x256xf32>
    %61 = vector.shape_cast %60 : vector<1x128x256xf32> to vector<128x256xf32>
    %cst_45 = arith.constant dense<0.000000e+00> : vector<16x256xf32>
    %62 = tpu.matmul %0, %61, %cst_45 {dimension_numbers = #tpu.dot_dimension_numbers<[1], [0], [0], [1], [0, 0, 1, 1], [], []>} : vector<16x128xf32>, vector<128x256xf32>, vector<16x256xf32> -> vector<16x256xf32>
    %c6_46 = arith.constant 6 : index
    %c0_47 = arith.constant 0 : index
    %c0_48 = arith.constant 0 : index
    %63 = vector.load %arg3[%c6_46, %c0_47, %c0_48] : memref<9x1x256xf32, #tpu.memory_space<vmem>>, vector<1x1x256xf32>
    %64 = vector.shape_cast %63 : vector<1x1x256xf32> to vector<1x256xf32>
    %65 = vector.broadcast %64 : vector<1x256xf32> to vector<16x256xf32>
    %66 = arith.addf %62, %65 : vector<16x256xf32>
    %cst_49 = arith.constant 0.000000e+00 : f32
    %67 = vector.broadcast %cst_49 : f32 to vector<16x256xf32>
    %68 = arith.maximumf %66, %67 : vector<16x256xf32>
    %69 = arith.maximumf %59, %68 : vector<16x256xf32>
    %c7 = arith.constant 7 : index
    %c0_50 = arith.constant 0 : index
    %c0_51 = arith.constant 0 : index
    %70 = vector.load %arg2[%c7, %c0_50, %c0_51] : memref<9x128x256xf32, #tpu.memory_space<vmem>>, vector<1x128x256xf32>
    %71 = vector.shape_cast %70 : vector<1x128x256xf32> to vector<128x256xf32>
    %cst_52 = arith.constant dense<0.000000e+00> : vector<16x256xf32>
    %72 = tpu.matmul %0, %71, %cst_52 {dimension_numbers = #tpu.dot_dimension_numbers<[1], [0], [0], [1], [0, 0, 1, 1], [], []>} : vector<16x128xf32>, vector<128x256xf32>, vector<16x256xf32> -> vector<16x256xf32>
    %c7_53 = arith.constant 7 : index
    %c0_54 = arith.constant 0 : index
    %c0_55 = arith.constant 0 : index
    %73 = vector.load %arg3[%c7_53, %c0_54, %c0_55] : memref<9x1x256xf32, #tpu.memory_space<vmem>>, vector<1x1x256xf32>
    %74 = vector.shape_cast %73 : vector<1x1x256xf32> to vector<1x256xf32>
    %75 = vector.broadcast %74 : vector<1x256xf32> to vector<16x256xf32>
    %76 = arith.addf %72, %75 : vector<16x256xf32>
    %cst_56 = arith.constant 0.000000e+00 : f32
    %77 = vector.broadcast %cst_56 : f32 to vector<16x256xf32>
    %78 = arith.maximumf %76, %77 : vector<16x256xf32>
    %79 = arith.maximumf %69, %78 : vector<16x256xf32>
    %c8 = arith.constant 8 : index
    %c0_57 = arith.constant 0 : index
    %c0_58 = arith.constant 0 : index
    %80 = vector.load %arg2[%c8, %c0_57, %c0_58] : memref<9x128x256xf32, #tpu.memory_space<vmem>>, vector<1x128x256xf32>
    %81 = vector.shape_cast %80 : vector<1x128x256xf32> to vector<128x256xf32>
    %cst_59 = arith.constant dense<0.000000e+00> : vector<16x256xf32>
    %82 = tpu.matmul %0, %81, %cst_59 {dimension_numbers = #tpu.dot_dimension_numbers<[1], [0], [0], [1], [0, 0, 1, 1], [], []>} : vector<16x128xf32>, vector<128x256xf32>, vector<16x256xf32> -> vector<16x256xf32>
    %c8_60 = arith.constant 8 : index
    %c0_61 = arith.constant 0 : index
    %c0_62 = arith.constant 0 : index
    %83 = vector.load %arg3[%c8_60, %c0_61, %c0_62] : memref<9x1x256xf32, #tpu.memory_space<vmem>>, vector<1x1x256xf32>
    %84 = vector.shape_cast %83 : vector<1x1x256xf32> to vector<1x256xf32>
    %85 = vector.broadcast %84 : vector<1x256xf32> to vector<16x256xf32>
    %86 = arith.addf %82, %85 : vector<16x256xf32>
    %cst_63 = arith.constant 0.000000e+00 : f32
    %87 = vector.broadcast %cst_63 : f32 to vector<16x256xf32>
    %88 = arith.maximumf %86, %87 : vector<16x256xf32>
    %89 = arith.maximumf %79, %88 : vector<16x256xf32>
    %c0_64 = arith.constant 0 : index
    %c0_65 = arith.constant 0 : index
    %90 = vector.load %arg4[%c0_64, %c0_65] : memref<256x256xf32, #tpu.memory_space<vmem>>, vector<256x256xf32>
    %cst_66 = arith.constant dense<0.000000e+00> : vector<16x256xf32>
    %91 = tpu.matmul %89, %90, %cst_66 {dimension_numbers = #tpu.dot_dimension_numbers<[1], [0], [0], [1], [0, 0, 1, 1], [], []>} : vector<16x256xf32>, vector<256x256xf32>, vector<16x256xf32> -> vector<16x256xf32>
    %c0_67 = arith.constant 0 : index
    %c0_68 = arith.constant 0 : index
    %92 = vector.load %arg5[%c0_67, %c0_68] : memref<1x256xf32, #tpu.memory_space<vmem>>, vector<1x256xf32>
    %93 = vector.broadcast %92 : vector<1x256xf32> to vector<16x256xf32>
    %94 = arith.addf %91, %93 : vector<16x256xf32>
    %95 = vector.extract_strided_slice %94 {offsets = [0, 0], sizes = [16, 128], strides = [1, 1]} : vector<16x256xf32> to vector<16x128xf32>
    %96 = arith.negf %95 : vector<16x128xf32>
    %97 = math.exp %96 : vector<16x128xf32>
    %cst_69 = arith.constant 1.000000e+00 : f32
    %98 = vector.broadcast %cst_69 : f32 to vector<16x128xf32>
    %99 = arith.addf %98, %97 : vector<16x128xf32>
    %100 = arith.divf %98, %99 : vector<16x128xf32>
    %101 = vector.extract_strided_slice %94 {offsets = [0, 128], sizes = [16, 128], strides = [1, 1]} : vector<16x256xf32> to vector<16x128xf32>
    %cst_70 = arith.constant 0.000000e+00 : f32
    %102 = vector.broadcast %cst_70 : f32 to vector<16x128xf32>
    %103 = arith.maximumf %101, %102 : vector<16x128xf32>
    %104 = arith.mulf %100, %103 : vector<16x128xf32>
    %cst_71 = arith.constant 1.000000e+00 : f32
    %105 = vector.broadcast %cst_71 : f32 to vector<16x128xf32>
    %106 = arith.subf %105, %100 : vector<16x128xf32>
    %107 = vector.extract_strided_slice %89 {offsets = [0, 0], sizes = [16, 128], strides = [1, 1]} : vector<16x256xf32> to vector<16x128xf32>
    %108 = arith.mulf %106, %107 : vector<16x128xf32>
    %109 = arith.addf %104, %108 : vector<16x128xf32>
    %c0_72 = arith.constant 0 : index
    %c0_73 = arith.constant 0 : index
    %110 = vector.load %arg6[%c0_72, %c0_73] : memref<16x128xf32, #tpu.memory_space<vmem>>, vector<16x128xf32>
    tpu.vector_store %arg6[%c0_72, %c0_73], %109 {strides = array<i32>} : memref<16x128xf32, #tpu.memory_space<vmem>>, vector<16x128xf32>,
    return
  }
  func.func @transform_0(%arg0: i32) -> (i32, i32) {
    %c0_i32 = arith.constant 0 : i32
    %c0_i32_0 = arith.constant 0 : i32
    return %arg0, %c0_i32 : i32, i32
  }
  func.func @transform_1(%arg0: i32) -> (i32, i32, i32) {
    %c0_i32 = arith.constant 0 : i32
    %c0_i32_0 = arith.constant 0 : i32
    %c0_i32_1 = arith.constant 0 : i32
    %c0_i32_2 = arith.constant 0 : i32
    return %c0_i32, %c0_i32_0, %c0_i32_1 : i32, i32, i32
  }
  func.func @transform_2(%arg0: i32) -> (i32, i32, i32) {
    %c0_i32 = arith.constant 0 : i32
    %c0_i32_0 = arith.constant 0 : i32
    %c0_i32_1 = arith.constant 0 : i32
    %c0_i32_2 = arith.constant 0 : i32
    return %c0_i32, %c0_i32_0, %c0_i32_1 : i32, i32, i32
  }
  func.func @transform_3(%arg0: i32) -> (i32, i32) {
    %c0_i32 = arith.constant 0 : i32
    %c0_i32_0 = arith.constant 0 : i32
    %c0_i32_1 = arith.constant 0 : i32
    return %c0_i32, %c0_i32_0 : i32, i32
  }
  func.func @transform_4(%arg0: i32) -> (i32, i32) {
    %c0_i32 = arith.constant 0 : i32
    %c0_i32_0 = arith.constant 0 : i32
    %c0_i32_1 = arith.constant 0 : i32
    return %c0_i32, %c0_i32_0 : i32, i32
  }
  func.func @transform_5(%arg0: i32) -> (i32, i32) {
    %c0_i32 = arith.constant 0 : i32
    %c0_i32_0 = arith.constant 0 : i32
    return %arg0, %c0_i32 : i32, i32
  }
}

</mosaic_0001>

<llo_original>
// kernel: tpu_custom_call.1
$region0: #{tpu_custom_call.1}
  #allocation0 [shape = 'u32[]', space=smem, size = 0x4, offset = 0x4, fixed_abs, tag = 'smem constant byte address 0x4 - core index']
  #allocation1 [shape = 'u32[144,128]{1,0:T(1,128)}', space=vmem, size = 0x12000, scoped, tag = 'internal scratch']
  %s0 = inlined_call_operand.hbm [shape: f32[32,128], index: 0, kind: input, shape index: {}]
  %s1 = inlined_call_operand.hbm [shape: f32[9,128,256], index: 1, kind: input, shape index: {}]
  %s2 = inlined_call_operand.hbm [shape: f32[9,1,256], index: 2, kind: input, shape index: {}]
  %s3 = inlined_call_operand.hbm [shape: f32[256,256], index: 3, kind: input, shape index: {}]
  %s4 = inlined_call_operand.hbm [shape: f32[1,256], index: 4, kind: input, shape index: {}]
  %s5 = inlined_call_operand.hbm [shape: f32[32,128], index: 5, kind: output, shape index: {}]
  %s6 = sld [smem:[#allocation0]]
  $region73: #{tpu_custom_call.1} parent=0
    _
  %s8 = ssub.s32 1, %s6
  %s9 = scalar_select 0, %s8, %s6
  $region1: #{tpu_custom_call.1} parent=0
    #allocation2 [shape = 'u8[16384]{0}', space=vmem, size = 0x4000, scoped, tag = 'input window, operand 0']
    #allocation3 [shape = 's32[2]{0}', space=sflag, size = 0x8, scoped, tag = 'scoped memory for tpu_custom_call.1']
    #allocation4 [shape = 's32[2]{0}', space=sflag, size = 0x8, scoped, tag = 'scoped memory for tpu_custom_call.1']
    #allocation5 [shape = 'u8[1179648]{0}', space=vmem, size = 0x120000, scoped, tag = 'input window, operand 1, single buffered']
    #allocation6 [shape = 's32[1]{0}', space=sflag, size = 0x4, scoped, tag = 'scoped memory for tpu_custom_call.1']
    #allocation7 [shape = 'u8[9216]{0}', space=vmem, size = 0x2400, scoped, tag = 'input window, operand 2, single buffered']
    #allocation8 [shape = 'u8[262144]{0}', space=vmem, size = 0x40000, scoped, tag = 'input window, operand 3, single buffered']
    #allocation9 [shape = 's32[1]{0}', space=sflag, size = 0x4, scoped, tag = 'scoped memory for tpu_custom_call.1']
    #allocation10 [shape = 'u8[1024]{0}', space=vmem, size = 0x400, scoped, tag = 'input window, operand 4, single buffered']
    #allocation11 [shape = 'u8[16384]{0}', space=vmem, size = 0x4000, scoped, tag = 'output window, operand 0']
    %10 = vsyncpa [#allocation3], 0
    %s11 = scalar_lea.sflag [#allocation3], 1
    %12 = vsyncpa %s11, 0
    %13 = vsyncpa [#allocation6], 0
    %14 = vsyncpa [#allocation9], 0
    %15 = vsyncpa [#allocation4], 0
    %s16 = scalar_lea.sflag [#allocation4], 1
    %17 = vsyncpa %s16, 0
    loop: start=0, step=1, limit=4
    $region2: #{tpu_custom_call.1} parent=1 // loop_pre_header
      _
    $region3: #{tpu_custom_call.1} parent=1 // loop_header
      %s19 = sphi 0, %s23
      %p20 = scmp.ge.s32.totalorder %s19, 4
      %s29 = sphi 0, %s31
      %s32 = sphi 0, %s29
      %s33 = sphi 0, %s32
      %s49 = sphi 0, %s33
      %s53 = sphi 0, %s53
      %s55 = sphi 0, %s53
      %s56 = sphi 0, %s55
      %s70 = sphi 0, %s56
      %s74 = sphi 0, %s74
      %s76 = sphi 0, %s74
      %s77 = sphi 0, %s76
      %s91 = sphi 0, %s77
      %s95 = sphi 0, %s95
      %s97 = sphi 0, %s95
      %s98 = sphi 0, %s97
      %s112 = sphi 0, %s98
      %s116 = sphi 0, %s116
      %s118 = sphi 0, %s116
      %s119 = sphi 0, %s118
      %s133 = sphi 0, %s119
      %s139 = sphi 0, %s141
      %s142 = sphi 0, %s139
      %s143 = sphi 0, %s142
      %s159 = sphi 0, %s143
    $region4: #{tpu_custom_call.1} parent=1 // loop_header_branch
      %22 = sbr.rel (%p20) target = $region8
    $region5: #{tpu_custom_call.1} parent=1 // loop_body
      %s24 = ssub.s32 %s19, 1
      %s25 = ssub.s32 %s19, 2
      %s26 = sadd.s32 %s19, 1
      %s27 = ssub.s32 %s19, %s26
      %p28 = scmp.eq.s32.totalorder %s27, 0
      %s30 = sadd.s32 %s29, 1
      %s31 = scalar_select %p28, %s29, %s30
      %p34 = pneg %p28
      %p35 = scmp.eq.s32.totalorder %s19, 1
      %p36 = por %p34, %p35
      %p37 = scmp.ne.s32.totalorder %s29, %s32
      %p38 = scmp.eq.s32.totalorder %s19, 0
      %p39 = por %p37, %p38
      %p40 = scmp.ne.s32.totalorder %s29, %s32
      %p41 = scmp.eq.s32.totalorder %s24, 1
      %p42 = por %p40, %p41
      %p43 = scmp.ne.s32.totalorder %s32, %s33
      %p44 = scmp.eq.s32.totalorder %s24, 0
      %p45 = por %p43, %p44
      %p46 = scmp.ne.s32.totalorder %s32, %s33
      %p47 = scmp.eq.s32.totalorder %s25, 1
      %p48 = por %p46, %p47
      %p50 = scmp.ne.s32.totalorder %s33, %s49
      %p51 = scmp.eq.s32.totalorder %s25, 0
      %p52 = por %p50, %p51
      %s54 = sadd.s32 %s53, 1
      %p57 = scmp.eq.s32.totalorder %s19, 1
      %p58 = scmp.ne.s32.totalorder %s53, %s55
      %p59 = scmp.eq.s32.totalorder %s19, 0
      %p60 = por %p58, %p59
      %p61 = scmp.ne.s32.totalorder %s53, %s55
      %p62 = scmp.eq.s32.totalorder %s24, 1
      %p63 = por %p61, %p62
      %p64 = scmp.ne.s32.totalorder %s55, %s56
      %p65 = scmp.eq.s32.totalorder %s24, 0
      %p66 = por %p64, %p65
      %p67 = scmp.ne.s32.totalorder %s55, %s56
      %p68 = scmp.eq.s32.totalorder %s25, 1
      %p69 = por %p67, %p68
      %p71 = scmp.ne.s32.totalorder %s56, %s70
      %p72 = scmp.eq.s32.totalorder %s25, 0
      %p73 = por %p71, %p72
      %s75 = sadd.s32 %s74, 1
      %p78 = scmp.eq.s32.totalorder %s19, 1
      %p79 = scmp.ne.s32.totalorder %s74, %s76
      %p80 = scmp.eq.s32.totalorder %s19, 0
      %p81 = por %p79, %p80
      %p82 = scmp.ne.s32.totalorder %s74, %s76
      %p83 = scmp.eq.s32.totalorder %s24, 1
      %p84 = por %p82, %p83
      %p85 = scmp.ne.s32.totalorder %s76, %s77
      %p86 = scmp.eq.s32.totalorder %s24, 0
      %p87 = por %p85, %p86
      %p88 = scmp.ne.s32.totalorder %s76, %s77
      %p89 = scmp.eq.s32.totalorder %s25, 1
      %p90 = por %p88, %p89
      %p92 = scmp.ne.s32.totalorder %s77, %s91
      %p93 = scmp.eq.s32.totalorder %s25, 0
      %p94 = por %p92, %p93
      %s96 = sadd.s32 %s95, 1
      %p99 = scmp.eq.s32.totalorder %s19, 1
      %p100 = scmp.ne.s32.totalorder %s95, %s97
      %p101 = scmp.eq.s32.totalorder %s19, 0
      %p102 = por %p100, %p101
      %p103 = scmp.ne.s32.totalorder %s95, %s97
      %p104 = scmp.eq.s32.totalorder %s24, 1
      %p105 = por %p103, %p104
      %p106 = scmp.ne.s32.totalorder %s97, %s98
      %p107 = scmp.eq.s32.totalorder %s24, 0
      %p108 = por %p106, %p107
      %p109 = scmp.ne.s32.totalorder %s97, %s98
      %p110 = scmp.eq.s32.totalorder %s25, 1
      %p111 = por %p109, %p110
      %p113 = scmp.ne.s32.totalorder %s98, %s112
      %p114 = scmp.eq.s32.totalorder %s25, 0
      %p115 = por %p113, %p114
      %s117 = sadd.s32 %s116, 1
      %p120 = scmp.eq.s32.totalorder %s19, 1
      %p121 = scmp.ne.s32.totalorder %s116, %s118
      %p122 = scmp.eq.s32.totalorder %s19, 0
      %p123 = por %p121, %p122
      %p124 = scmp.ne.s32.totalorder %s116, %s118
      %p125 = scmp.eq.s32.totalorder %s24, 1
      %p126 = por %p124, %p125
      %p127 = scmp.ne.s32.totalorder %s118, %s119
      %p128 = scmp.eq.s32.totalorder %s24, 0
      %p129 = por %p127, %p128
      %p130 = scmp.ne.s32.totalorder %s118, %s119
      %p131 = scmp.eq.s32.totalorder %s25, 1
      %p132 = por %p130, %p131
      %p134 = scmp.ne.s32.totalorder %s119, %s133
      %p135 = scmp.eq.s32.totalorder %s25, 0
      %p136 = por %p134, %p135
      %s137 = ssub.s32 %s19, %s26
      %p138 = scmp.eq.s32.totalorder %s137, 0
      %s140 = sadd.s32 %s139, 1
      %s141 = scalar_select %p138, %s139, %s140
      %p144 = pneg %p138
      %p145 = scmp.eq.s32.totalorder %s19, 1
      %p146 = por %p144, %p145
      %p147 = scmp.ne.s32.totalorder %s139, %s142
      %p148 = scmp.eq.s32.totalorder %s19, 0
      %p149 = por %p147, %p148
      %p150 = scmp.ne.s32.totalorder %s139, %s142
      %p151 = scmp.eq.s32.totalorder %s24, 1
      %p152 = por %p150, %p151
      %p153 = scmp.ne.s32.totalorder %s142, %s143
      %p154 = scmp.eq.s32.totalorder %s24, 0
      %p155 = por %p153, %p154
      %p156 = scmp.ne.s32.totalorder %s142, %s143
      %p157 = scmp.eq.s32.totalorder %s25, 1
      %p158 = por %p156, %p157
      %p160 = scmp.ne.s32.totalorder %s143, %s159
      %p161 = scmp.eq.s32.totalorder %s25, 0
      %p162 = por %p160, %p161
      %p163 = scmp.le.s32.totalorder 1, %s19
      %p164 = scmp.lt.s32.totalorder %s19, 3
      %p165 = pnand %p163, %p164
      %p166 = pneg %p165
      // Predicated region
      $region9: #{tpu_custom_call.1} parent=5 // pred_check
        _
      $region10: #{tpu_custom_call.1} parent=5 // pred_check_branch
        %168 = sbr.rel (%p165) target = $region12
      $region11: #{tpu_custom_call.1} parent=5 // pred_region
        %s169 = ssub.s32 %s19, 1
        // Predicated region
        $region13: #{tpu_custom_call.1} parent=11 // pred_check
          %p170 = pneg %p66
        $region14: #{tpu_custom_call.1} parent=11 // pred_check_branch
          %172 = sbr.rel (%p170) target = $region16
        $region15: #{tpu_custom_call.1} parent=11 // pred_region
          %s174 = ssub.s32 36864, 36864
          %175 = vsyncadd [#allocation6], %s174
          %s176 = sshll.u32 [#allocation5], 4
          %s177 = int_to_ptr.vmem [resolvable:$true] %s176
          %182 = dma.hbm_to_vmem [thread:$0]  %s1, 36864, %s177, [#allocation6], 256, 256, 16
        $region16: #{tpu_custom_call.1} parent=11 // pred_fallthru
          _
        // Predicated region
        $region17: #{tpu_custom_call.1} parent=11 // pred_check
          %p183 = pneg %p87
        $region18: #{tpu_custom_call.1} parent=11 // pred_check_branch
          %185 = sbr.rel (%p183) target = $region20
        $region19: #{tpu_custom_call.1} parent=11 // pred_region
          %s187 = ssub.s32 288, 288
          %188 = vsyncadd [#allocation6], %s187
          %s189 = sshll.u32 [#allocation7], 4
          %s190 = int_to_ptr.vmem [resolvable:$true] %s189
          %195 = dma.hbm_to_vmem [thread:$0]  %s2, 288, %s190, [#allocation6], 32, 32, 2
        $region20: #{tpu_custom_call.1} parent=11 // pred_fallthru
          _
        // Predicated region
        $region21: #{tpu_custom_call.1} parent=11 // pred_check
          %p196 = pneg %p108
        $region22: #{tpu_custom_call.1} parent=11 // pred_check_branch
          %198 = sbr.rel (%p196) target = $region24
        $region23: #{tpu_custom_call.1} parent=11 // pred_region
          %s200 = ssub.s32 8192, 8192
          %201 = vsyncadd [#allocation9], %s200
          %s202 = sshll.u32 [#allocation8], 4
          %s203 = int_to_ptr.vmem [resolvable:$true] %s202
          %208 = dma.hbm_to_vmem [thread:$0]  %s3, 8192, %s203, [#allocation9], 256, 256, 16
        $region24: #{tpu_custom_call.1} parent=11 // pred_fallthru
          _
        // Predicated region
        $region25: #{tpu_custom_call.1} parent=11 // pred_check
          %p209 = pneg %p129
        $region26: #{tpu_custom_call.1} parent=11 // pred_check_branch
          %211 = sbr.rel (%p209) target = $region28
        $region27: #{tpu_custom_call.1} parent=11 // pred_region
          %s213 = ssub.s32 32, 32
          %214 = vsyncadd [#allocation9], %s213
          %s216 = sshll.u32 [#allocation10], 4
          %s217 = int_to_ptr.vmem [resolvable:$true] %s216
          %219 = dma.hbm_to_vmem [thread:$0]  %s4, 32, %s217, [#allocation9]
        $region28: #{tpu_custom_call.1} parent=11 // pred_fallthru
          _
      $region12: #{tpu_custom_call.1} parent=5 // pred_fallthru
        _
      %p220 = scmp.lt.s32.totalorder %s19, 2
      // Predicated region
      $region29: #{tpu_custom_call.1} parent=5 // pred_check
        %p221 = pneg %p220
      $region30: #{tpu_custom_call.1} parent=5 // pred_check_branch
        %223 = sbr.rel (%p221) target = $region32
      $region31: #{tpu_custom_call.1} parent=5 // pred_region
        // Predicated region
        $region33: #{tpu_custom_call.1} parent=31 // pred_check
          %p224 = pneg %p39
        $region34: #{tpu_custom_call.1} parent=31 // pred_check_branch
          %226 = sbr.rel (%p224) target = $region36
        $region35: #{tpu_custom_call.1} parent=31 // pred_region
          %s227 = sand.u32 %s29, 1
          %s228 = scalar_lea.sflag [#allocation3], %s227
          %s229 = sand.u32 %s29, 1
          %s230 = smul.addr %s229, 16
          %s231 = scalar_lea.vmem [#allocation2], %s230
          %s232 = smul.u32 2, %s19
          %s234 = ssub.s32 256, 256
          %235 = vsyncadd %s228, %s234
          %s236 = smul.addr %s232, 128
          %s237 = scalar_lea.hbm %s0, %s236
          %s238 = sshll.u32 %s231, 4
          %s239 = int_to_ptr.vmem [resolvable:$true] %s238
          %244 = dma.hbm_to_vmem [thread:$0]  %s237, 256, %s239, %s228, 128, 128, 8
        $region36: #{tpu_custom_call.1} parent=31 // pred_fallthru
          _
      $region32: #{tpu_custom_call.1} parent=5 // pred_fallthru
        _
      %p245 = scmp.le.s32.totalorder 1, %s19
      %p246 = scmp.lt.s32.totalorder %s19, 3
      %p247 = pnand %p245, %p246
      %p248 = pneg %p247
      // Predicated region
      $region37: #{tpu_custom_call.1} parent=5 // pred_check
        _
      $region38: #{tpu_custom_call.1} parent=5 // pred_check_branch
        %250 = sbr.rel (%p247) target = $region40
      $region39: #{tpu_custom_call.1} parent=5 // pred_region
        %s251 = ssub.s32 %s19, 1
        %s252 = sand.u32 %s32, 1
        %s253 = scalar_lea.sflag [#allocation3], %s252
        %s254 = sand.u32 %s32, 1
        %s255 = smul.addr %s254, 16
        %s256 = scalar_lea.vmem [#allocation2], %s255
        // Predicated region
        $region41: #{tpu_custom_call.1} parent=39 // pred_check
          %p257 = pneg %p45
        $region42: #{tpu_custom_call.1} parent=39 // pred_check_branch
          %259 = sbr.rel (%p257) target = $region44
        $region43: #{tpu_custom_call.1} parent=39 // pred_region
          %260 = dma.done %s253, 256
        $region44: #{tpu_custom_call.1} parent=39 // pred_fallthru
          _
        // Predicated region
        $region45: #{tpu_custom_call.1} parent=39 // pred_check
          %p261 = pneg %p66
        $region46: #{tpu_custom_call.1} parent=39 // pred_check_branch
          %263 = sbr.rel (%p261) target = $region48
        $region47: #{tpu_custom_call.1} parent=39 // pred_region
          %264 = dma.done [#allocation6], 36864
        $region48: #{tpu_custom_call.1} parent=39 // pred_fallthru
          _
        // Predicated region
        $region49: #{tpu_custom_call.1} parent=39 // pred_check
          %p265 = pneg %p87
        $region50: #{tpu_custom_call.1} parent=39 // pred_check_branch
          %267 = sbr.rel (%p265) target = $region52
        $region51: #{tpu_custom_call.1} parent=39 // pred_region
          %268 = dma.done [#allocation6], 288
        $region52: #{tpu_custom_call.1} parent=39 // pred_fallthru
          _
        // Predicated region
        $region53: #{tpu_custom_call.1} parent=39 // pred_check
          %p269 = pneg %p108
        $region54: #{tpu_custom_call.1} parent=39 // pred_check_branch
          %271 = sbr.rel (%p269) target = $region56
        $region55: #{tpu_custom_call.1} parent=39 // pred_region
          %272 = dma.done [#allocation9], 8192
        $region56: #{tpu_custom_call.1} parent=39 // pred_fallthru
          _
        // Predicated region
        $region57: #{tpu_custom_call.1} parent=39 // pred_check
          %p273 = pneg %p129
        $region58: #{tpu_custom_call.1} parent=39 // pred_check_branch
          %275 = sbr.rel (%p273) target = $region60
        $region59: #{tpu_custom_call.1} parent=39 // pred_region
          %276 = dma.done [#allocation9], 32
        $region60: #{tpu_custom_call.1} parent=39 // pred_fallthru
          _
        %s277 = sand.u32 %s32, 1
        %s278 = scalar_lea.sflag [#allocation3], %s277
        %s279 = sand.u32 %s32, 1
        %s280 = smul.addr %s279, 16
        %s281 = scalar_lea.vmem [#allocation2], %s280
        %p282 = pneg %p45
        %p283 = pneg %p42
        %p284 = pneg %p66
        %p285 = pneg %p63
        %p286 = pneg %p87
        %p287 = pneg %p84
        %p288 = pneg %p108
        %p289 = pneg %p105
        %p290 = pneg %p129
        %p291 = pneg %p126
        %p292 = pneg %p155
        %p293 = pneg %p152
        %s294 = sand.u32 %s142, 1
        %s295 = scalar_lea.sflag [#allocation4], %s294
        %s296 = sand.u32 %s142, 1
        %s297 = smul.addr %s296, 16
        %s298 = scalar_lea.vmem [#allocation11], %s297
        %s299 = smul.u32 2, %s24
        %s300 = smul.u32 2, %s24
        %v301 = vld [vmem:[%s256] sm:$0xff]
        %v302 = vld [vmem:[%s256 + $0x8] sm:$0xff]
        %v303 = vld [vmem:[#allocation5] sm:$0xff]
        %v304 = vld [vmem:[#allocation5 + $0x8] sm:$0xff]
        %v305 = vld [vmem:[#allocation5 + $0x10] sm:$0xff]
        %v306 = vld [vmem:[#allocation5 + $0x18] sm:$0xff]
        %v307 = vld [vmem:[#allocation5 + $0x20] sm:$0xff]
        %v308 = vld [vmem:[#allocation5 + $0x28] sm:$0xff]
        %v309 = vld [vmem:[#allocation5 + $0x30] sm:$0xff]
        %v310 = vld [vmem:[#allocation5 + $0x38] sm:$0xff]
        %v311 = vld [vmem:[#allocation5 + $0x40] sm:$0xff]
        %v312 = vld [vmem:[#allocation5 + $0x48] sm:$0xff]
        %v313 = vld [vmem:[#allocation5 + $0x50] sm:$0xff]
        %v314 = vld [vmem:[#allocation5 + $0x58] sm:$0xff]
        %v315 = vld [vmem:[#allocation5 + $0x60] sm:$0xff]
        %v316 = vld [vmem:[#allocation5 + $0x68] sm:$0xff]
        %v317 = vld [vmem:[#allocation5 + $0x70] sm:$0xff]
        %v318 = vld [vmem:[#allocation5 + $0x78] sm:$0xff]
        %v319 = vld [vmem:[#allocation5 + $0x80] sm:$0xff]
        %v320 = vld [vmem:[#allocation5 + $0x88] sm:$0xff]
        %v321 = vld [vmem:[#allocation5 + $0x90] sm:$0xff]
        %v322 = vld [vmem:[#allocation5 + $0x98] sm:$0xff]
        %v323 = vld [vmem:[#allocation5 + $0xa0] sm:$0xff]
        %v324 = vld [vmem:[#allocation5 + $0xa8] sm:$0xff]
        %v325 = vld [vmem:[#allocation5 + $0xb0] sm:$0xff]
        %v326 = vld [vmem:[#allocation5 + $0xb8] sm:$0xff]
        %v327 = vld [vmem:[#allocation5 + $0xc0] sm:$0xff]
        %v328 = vld [vmem:[#allocation5 + $0xc8] sm:$0xff]
        %v329 = vld [vmem:[#allocation5 + $0xd0] sm:$0xff]
        %v330 = vld [vmem:[#allocation5 + $0xd8] sm:$0xff]
        %v331 = vld [vmem:[#allocation5 + $0xe0] sm:$0xff]
        %v332 = vld [vmem:[#allocation5 + $0xe8] sm:$0xff]
        %v333 = vld [vmem:[#allocation5 + $0xf0] sm:$0xff]
        %v334 = vld [vmem:[#allocation5 + $0xf8] sm:$0xff]
        %v335 = vld [vmem:[#allocation7] sm:$0x3]
        %v337 = vlaneseq
        %v338 = vshrl.u32 %v337, 7
        %v339 = vsub.s32 0, %v338
        %v340 = vrot.slane %v335, %v339
        %v341 = vlaneseq
        %v342 = vshrl.u32 %v341, 7
        %v343 = vsub.s32 1, %v342
        %v344 = vrot.slane %v335, %v343
        %347 = vmatprep.subr.mxu0 %v304
        %348 = vmatpush1.msra.mxu0 %v303
        %349 = vmatprep.subr.mxu0 %v306
        %350 = vmatpush1.msra.mxu0 %v305
        %351 = vmatprep.subr.mxu0 %v308
        %352 = vmatpush1.msra.mxu0 %v307
        %353 = vmatprep.subr.mxu0 %v310
        %354 = vmatpush1.msra.mxu0 %v309
        %355 = vmatprep.subr.mxu0 %v312
        %356 = vmatpush1.msra.mxu0 %v311
        %357 = vmatprep.subr.mxu0 %v314
        %358 = vmatpush1.msra.mxu0 %v313
        %359 = vmatprep.subr.mxu0 %v316
        %360 = vmatpush1.msra.mxu0 %v315
        %361 = vmatprep.subr.mxu0 %v318
        %362 = vmatpush1.msra.mxu0 %v317
        %363 = vmatprep.subr.mxu0 %v320
        %364 = vmatpush1.msra.mxu0 %v319
        %365 = vmatprep.subr.mxu0 %v322
        %366 = vmatpush1.msra.mxu0 %v321
        %367 = vmatprep.subr.mxu0 %v324
        %368 = vmatpush1.msra.mxu0 %v323
        %369 = vmatprep.subr.mxu0 %v326
        %370 = vmatpush1.msra.mxu0 %v325
        %371 = vmatprep.subr.mxu0 %v328
        %372 = vmatpush1.msra.mxu0 %v327
        %373 = vmatprep.subr.mxu0 %v330
        %374 = vmatpush1.msra.mxu0 %v329
        %375 = vmatprep.subr.mxu0 %v332
        %376 = vmatpush1.msra.mxu0 %v331
        %377 = vmatprep.subr.mxu0 %v334
        %378 = vmatpush1.msra.mxu0 %v333
        %379 = vmatprep.subr.mxu0 0.0
        %380 = vmatpush1.msra.mxu0 0.0
        %381 = vmatprep.subr.mxu0 0.0
        %382 = vmatpush1.msra.mxu0 0.0
        %383 = vmatprep.subr.mxu0 0.0
        %384 = vmatpush1.msra.mxu0 0.0
        %385 = vmatprep.subr.mxu0 0.0
        %386 = vmatpush1.msra.mxu0 0.0
        %387 = vmatprep.subr.mxu0 0.0
        %388 = vmatpush1.msra.mxu0 0.0
        %389 = vmatprep.subr.mxu0 0.0
        %390 = vmatpush1.msra.mxu0 0.0
        %391 = vmatprep.subr.mxu0 0.0
        %392 = vmatpush1.msra.mxu0 0.0
        %393 = vmatprep.subr.mxu0 0.0
        %394 = vmatpush1.msra.mxu0 0.0
        %395 = vmatprep.subr.mxu0 0.0
        %396 = vmatpush1.msra.mxu0 0.0
        %397 = vmatprep.subr.mxu0 0.0
        %398 = vmatpush1.msra.mxu0 0.0
        %399 = vmatprep.subr.mxu0 0.0
        %400 = vmatpush1.msra.mxu0 0.0
        %401 = vmatprep.subr.mxu0 0.0
        %402 = vmatpush1.msra.mxu0 0.0
        %403 = vmatprep.subr.mxu0 0.0
        %404 = vmatpush1.msra.mxu0 0.0
        %405 = vmatprep.subr.mxu0 0.0
        %406 = vmatpush1.msra.mxu0 0.0
        %407 = vmatprep.subr.mxu0 0.0
        %408 = vmatpush1.msra.mxu0 0.0
        %409 = vmatprep.subr.mxu0 0.0
        %410 = vmatpush1.msra.mxu0 0.0
        %411 = vmatprep.mubr.f32.mxu0 0.0
        %412 = vmatmul.mubr.f32.gmra.mrb[0].mxu0 %v301
        %v413 = vpop.f32.mrb[0].mxu0
        %v414 = vadd.f32 %v340, %v413
        %v415 = vpop.f32.mrb[0].mxu0
        %v416 = vadd.f32 %v344, %v415
        %417 = vmatprep.mubr.f32.mxu0 0.0
        %418 = vmatmul.mubr.f32.gmra.mrb[0].mxu0 %v302
        %v419 = vpop.f32.mrb[0].mxu0
        %v420 = vadd.f32 %v340, %v419
        %v421 = vpop.f32.mrb[0].mxu0
        %v422 = vadd.f32 %v344, %v421
        %423 = vdwg.mxu0
        %v424 = vmax.f32 %v414, 0.0
        %v425 = vmax.f32 %v416, 0.0
        %v426 = vmax.f32 %v420, 0.0
        %v427 = vmax.f32 %v422, 0.0
        %s428 = scalar_lea.vmem [#allocation5], 256
        %v429 = vld [vmem:[%s428] sm:$0xff]
        %v430 = vld [vmem:[%s428 + $0x8] sm:$0xff]
        %v431 = vld [vmem:[%s428 + $0x10] sm:$0xff]
        %v432 = vld [vmem:[%s428 + $0x18] sm:$0xff]
        %v433 = vld [vmem:[%s428 + $0x20] sm:$0xff]
        %v434 = vld [vmem:[%s428 + $0x28] sm:$0xff]
        %v435 = vld [vmem:[%s428 + $0x30] sm:$0xff]
        %v436 = vld [vmem:[%s428 + $0x38] sm:$0xff]
        %v437 = vld [vmem:[%s428 + $0x40] sm:$0xff]
        %v438 = vld [vmem:[%s428 + $0x48] sm:$0xff]
        %v439 = vld [vmem:[%s428 + $0x50] sm:$0xff]
        %v440 = vld [vmem:[%s428 + $0x58] sm:$0xff]
        %v441 = vld [vmem:[%s428 + $0x60] sm:$0xff]
        %v442 = vld [vmem:[%s428 + $0x68] sm:$0xff]
        %v443 = vld [vmem:[%s428 + $0x70] sm:$0xff]
        %v444 = vld [vmem:[%s428 + $0x78] sm:$0xff]
        %v445 = vld [vmem:[%s428 + $0x80] sm:$0xff]
        %v446 = vld [vmem:[%s428 + $0x88] sm:$0xff]
        %v447 = vld [vmem:[%s428 + $0x90] sm:$0xff]
        %v448 = vld [vmem:[%s428 + $0x98] sm:$0xff]
        %v449 = vld [vmem:[%s428 + $0xa0] sm:$0xff]
        %v450 = vld [vmem:[%s428 + $0xa8] sm:$0xff]
        %v451 = vld [vmem:[%s428 + $0xb0] sm:$0xff]
        %v452 = vld [vmem:[%s428 + $0xb8] sm:$0xff]
        %v453 = vld [vmem:[%s428 + $0xc0] sm:$0xff]
        %v454 = vld [vmem:[%s428 + $0xc8] sm:$0xff]
        %v455 = vld [vmem:[%s428 + $0xd0] sm:$0xff]
        %v456 = vld [vmem:[%s428 + $0xd8] sm:$0xff]
        %v457 = vld [vmem:[%s428 + $0xe0] sm:$0xff]
        %v458 = vld [vmem:[%s428 + $0xe8] sm:$0xff]
        %v459 = vld [vmem:[%s428 + $0xf0] sm:$0xff]
        %v460 = vld [vmem:[%s428 + $0xf8] sm:$0xff]
        %s461 = scalar_lea.vmem [#allocation7], 2
        %v462 = vld [vmem:[%s461] sm:$0x3]
        %v464 = vlaneseq
        %v465 = vshrl.u32 %v464, 7
        %v466 = vsub.s32 0, %v465
        %v467 = vrot.slane %v462, %v466
        %v468 = vlaneseq
        %v469 = vshrl.u32 %v468, 7
        %v470 = vsub.s32 1, %v469
        %v471 = vrot.slane %v462, %v470
        %474 = vmatprep.subr.mxu0 %v430
        %475 = vmatpush1.msra.mxu0 %v429
        %476 = vmatprep.subr.mxu0 %v432
        %477 = vmatpush1.msra.mxu0 %v431
        %478 = vmatprep.subr.mxu0 %v434
        %479 = vmatpush1.msra.mxu0 %v433
        %480 = vmatprep.subr.mxu0 %v436
        %481 = vmatpush1.msra.mxu0 %v435
        %482 = vmatprep.subr.mxu0 %v438
        %483 = vmatpush1.msra.mxu0 %v437
        %484 = vmatprep.subr.mxu0 %v440
        %485 = vmatpush1.msra.mxu0 %v439
        %486 = vmatprep.subr.mxu0 %v442
        %487 = vmatpush1.msra.mxu0 %v441
        %488 = vmatprep.subr.mxu0 %v444
        %489 = vmatpush1.msra.mxu0 %v443
        %490 = vmatprep.subr.mxu0 %v446
        %491 = vmatpush1.msra.mxu0 %v445
        %492 = vmatprep.subr.mxu0 %v448
        %493 = vmatpush1.msra.mxu0 %v447
        %494 = vmatprep.subr.mxu0 %v450
        %495 = vmatpush1.msra.mxu0 %v449
        %496 = vmatprep.subr.mxu0 %v452
        %497 = vmatpush1.msra.mxu0 %v451
        %498 = vmatprep.subr.mxu0 %v454
        %499 = vmatpush1.msra.mxu0 %v453
        %500 = vmatprep.subr.mxu0 %v456
        %501 = vmatpush1.msra.mxu0 %v455
        %502 = vmatprep.subr.mxu0 %v458
        %503 = vmatpush1.msra.mxu0 %v457
        %504 = vmatprep.subr.mxu0 %v460
        %505 = vmatpush1.msra.mxu0 %v459
        %506 = vmatprep.subr.mxu0 0.0
        %507 = vmatpush1.msra.mxu0 0.0
        %508 = vmatprep.subr.mxu0 0.0
        %509 = vmatpush1.msra.mxu0 0.0
        %510 = vmatprep.subr.mxu0 0.0
        %511 = vmatpush1.msra.mxu0 0.0
        %512 = vmatprep.subr.mxu0 0.0
        %513 = vmatpush1.msra.mxu0 0.0
        %514 = vmatprep.subr.mxu0 0.0
        %515 = vmatpush1.msra.mxu0 0.0
        %516 = vmatprep.subr.mxu0 0.0
        %517 = vmatpush1.msra.mxu0 0.0
        %518 = vmatprep.subr.mxu0 0.0
        %519 = vmatpush1.msra.mxu0 0.0
        %520 = vmatprep.subr.mxu0 0.0
        %521 = vmatpush1.msra.mxu0 0.0
        %522 = vmatprep.subr.mxu0 0.0
        %523 = vmatpush1.msra.mxu0 0.0
        %524 = vmatprep.subr.mxu0 0.0
        %525 = vmatpush1.msra.mxu0 0.0
        %526 = vmatprep.subr.mxu0 0.0
        %527 = vmatpush1.msra.mxu0 0.0
        %528 = vmatprep.subr.mxu0 0.0
        %529 = vmatpush1.msra.mxu0 0.0
        %530 = vmatprep.subr.mxu0 0.0
        %531 = vmatpush1.msra.mxu0 0.0
        %532 = vmatprep.subr.mxu0 0.0
        %533 = vmatpush1.msra.mxu0 0.0
        %534 = vmatprep.subr.mxu0 0.0
        %535 = vmatpush1.msra.mxu0 0.0
        %536 = vmatprep.subr.mxu0 0.0
        %537 = vmatpush1.msra.mxu0 0.0
        %538 = vmatprep.mubr.f32.mxu0 0.0
        %539 = vmatmul.mubr.f32.gmra.mrb[0].mxu0 %v301
        %v540 = vpop.f32.mrb[0].mxu0
        %v541 = vadd.f32 %v467, %v540
        %v542 = vpop.f32.mrb[0].mxu0
        %v543 = vadd.f32 %v471, %v542
        %544 = vmatprep.mubr.f32.mxu0 0.0
        %545 = vmatmul.mubr.f32.gmra.mrb[0].mxu0 %v302
        %v546 = vpop.f32.mrb[0].mxu0
        %v547 = vadd.f32 %v467, %v546
        %v548 = vpop.f32.mrb[0].mxu0
        %v549 = vadd.f32 %v471, %v548
        %550 = vdwg.mxu0
        %v551 = vmax.f32 %v541, 0.0
        %v552 = vmax.f32 %v543, 0.0
        %v553 = vmax.f32 %v547, 0.0
        %v554 = vmax.f32 %v549, 0.0
        %v555 = vmax.f32 %v424, %v551
        %v556 = vmax.f32 %v425, %v552
        %v557 = vmax.f32 %v426, %v553
        %v558 = vmax.f32 %v427, %v554
        %s559 = scalar_lea.vmem [#allocation5], 512
        %v560 = vld [vmem:[%s559] sm:$0xff]
        %v561 = vld [vmem:[%s559 + $0x8] sm:$0xff]
        %v562 = vld [vmem:[%s559 + $0x10] sm:$0xff]
        %v563 = vld [vmem:[%s559 + $0x18] sm:$0xff]
        %v564 = vld [vmem:[%s559 + $0x20] sm:$0xff]
        %v565 = vld [vmem:[%s559 + $0x28] sm:$0xff]
        %v566 = vld [vmem:[%s559 + $0x30] sm:$0xff]
        %v567 = vld [vmem:[%s559 + $0x38] sm:$0xff]
        %v568 = vld [vmem:[%s559 + $0x40] sm:$0xff]
        %v569 = vld [vmem:[%s559 + $0x48] sm:$0xff]
        %v570 = vld [vmem:[%s559 + $0x50] sm:$0xff]
        %v571 = vld [vmem:[%s559 + $0x58] sm:$0xff]
        %v572 = vld [vmem:[%s559 + $0x60] sm:$0xff]
        %v573 = vld [vmem:[%s559 + $0x68] sm:$0xff]
        %v574 = vld [vmem:[%s559 + $0x70] sm:$0xff]
        %v575 = vld [vmem:[%s559 + $0x78] sm:$0xff]
        %v576 = vld [vmem:[%s559 + $0x80] sm:$0xff]
        %v577 = vld [vmem:[%s559 + $0x88] sm:$0xff]
        %v578 = vld [vmem:[%s559 + $0x90] sm:$0xff]
        %v579 = vld [vmem:[%s559 + $0x98] sm:$0xff]
        %v580 = vld [vmem:[%s559 + $0xa0] sm:$0xff]
        %v581 = vld [vmem:[%s559 + $0xa8] sm:$0xff]
        %v582 = vld [vmem:[%s559 + $0xb0] sm:$0xff]
        %v583 = vld [vmem:[%s559 + $0xb8] sm:$0xff]
        %v584 = vld [vmem:[%s559 + $0xc0] sm:$0xff]
        %v585 = vld [vmem:[%s559 + $0xc8] sm:$0xff]
        %v586 = vld [vmem:[%s559 + $0xd0] sm:$0xff]
        %v587 = vld [vmem:[%s559 + $0xd8] sm:$0xff]
        %v588 = vld [vmem:[%s559 + $0xe0] sm:$0xff]
        %v589 = vld [vmem:[%s559 + $0xe8] sm:$0xff]
        %v590 = vld [vmem:[%s559 + $0xf0] sm:$0xff]
        %v591 = vld [vmem:[%s559 + $0xf8] sm:$0xff]
        %s592 = scalar_lea.vmem [#allocation7], 4
        %v593 = vld [vmem:[%s592] sm:$0x3]
        %v595 = vlaneseq
        %v596 = vshrl.u32 %v595, 7
        %v597 = vsub.s32 0, %v596
        %v598 = vrot.slane %v593, %v597
        %v599 = vlaneseq
        %v600 = vshrl.u32 %v599, 7
        %v601 = vsub.s32 1, %v600
        %v602 = vrot.slane %v593, %v601
        %605 = vmatprep.subr.mxu0 %v561
        %606 = vmatpush1.msra.mxu0 %v560
        %607 = vmatprep.subr.mxu0 %v563
        %608 = vmatpush1.msra.mxu0 %v562
        %609 = vmatprep.subr.mxu0 %v565
        %610 = vmatpush1.msra.mxu0 %v564
        %611 = vmatprep.subr.mxu0 %v567
        %612 = vmatpush1.msra.mxu0 %v566
        %613 = vmatprep.subr.mxu0 %v569
        %614 = vmatpush1.msra.mxu0 %v568
        %615 = vmatprep.subr.mxu0 %v571
        %616 = vmatpush1.msra.mxu0 %v570
        %617 = vmatprep.subr.mxu0 %v573
        %618 = vmatpush1.msra.mxu0 %v572
        %619 = vmatprep.subr.mxu0 %v575
        %620 = vmatpush1.msra.mxu0 %v574
        %621 = vmatprep.subr.mxu0 %v577
        %622 = vmatpush1.msra.mxu0 %v576
        %623 = vmatprep.subr.mxu0 %v579
        %624 = vmatpush1.msra.mxu0 %v578
        %625 = vmatprep.subr.mxu0 %v581
        %626 = vmatpush1.msra.mxu0 %v580
        %627 = vmatprep.subr.mxu0 %v583
        %628 = vmatpush1.msra.mxu0 %v582
        %629 = vmatprep.subr.mxu0 %v585
        %630 = vmatpush1.msra.mxu0 %v584
        %631 = vmatprep.subr.mxu0 %v587
        %632 = vmatpush1.msra.mxu0 %v586
        %633 = vmatprep.subr.mxu0 %v589
        %634 = vmatpush1.msra.mxu0 %v588
        %635 = vmatprep.subr.mxu0 %v591
        %636 = vmatpush1.msra.mxu0 %v590
        %637 = vmatprep.subr.mxu0 0.0
        %638 = vmatpush1.msra.mxu0 0.0
        %639 = vmatprep.subr.mxu0 0.0
        %640 = vmatpush1.msra.mxu0 0.0
        %641 = vmatprep.subr.mxu0 0.0
        %642 = vmatpush1.msra.mxu0 0.0
        %643 = vmatprep.subr.mxu0 0.0
        %644 = vmatpush1.msra.mxu0 0.0
        %645 = vmatprep.subr.mxu0 0.0
        %646 = vmatpush1.msra.mxu0 0.0
        %647 = vmatprep.subr.mxu0 0.0
        %648 = vmatpush1.msra.mxu0 0.0
        %649 = vmatprep.subr.mxu0 0.0
        %650 = vmatpush1.msra.mxu0 0.0
        %651 = vmatprep.subr.mxu0 0.0
        %652 = vmatpush1.msra.mxu0 0.0
        %653 = vmatprep.subr.mxu0 0.0
        %654 = vmatpush1.msra.mxu0 0.0
        %655 = vmatprep.subr.mxu0 0.0
        %656 = vmatpush1.msra.mxu0 0.0
        %657 = vmatprep.subr.mxu0 0.0
        %658 = vmatpush1.msra.mxu0 0.0
        %659 = vmatprep.subr.mxu0 0.0
        %660 = vmatpush1.msra.mxu0 0.0
        %661 = vmatprep.subr.mxu0 0.0
        %662 = vmatpush1.msra.mxu0 0.0
        %663 = vmatprep.subr.mxu0 0.0
        %664 = vmatpush1.msra.mxu0 0.0
        %665 = vmatprep.subr.mxu0 0.0
        %666 = vmatpush1.msra.mxu0 0.0
        %667 = vmatprep.subr.mxu0 0.0
        %668 = vmatpush1.msra.mxu0 0.0
        %669 = vmatprep.mubr.f32.mxu0 0.0
        %670 = vmatmul.mubr.f32.gmra.mrb[0].mxu0 %v301
        %v671 = vpop.f32.mrb[0].mxu0
        %v672 = vadd.f32 %v598, %v671
        %v673 = vpop.f32.mrb[0].mxu0
        %v674 = vadd.f32 %v602, %v673
        %675 = vmatprep.mubr.f32.mxu0 0.0
        %676 = vmatmul.mubr.f32.gmra.mrb[0].mxu0 %v302
        %v677 = vpop.f32.mrb[0].mxu0
        %v678 = vadd.f32 %v598, %v677
        %v679 = vpop.f32.mrb[0].mxu0
        %v680 = vadd.f32 %v602, %v679
        %681 = vdwg.mxu0
        %v682 = vmax.f32 %v672, 0.0
        %v683 = vmax.f32 %v674, 0.0
        %v684 = vmax.f32 %v678, 0.0
        %v685 = vmax.f32 %v680, 0.0
        %v686 = vmax.f32 %v555, %v682
        %v687 = vmax.f32 %v556, %v683
        %v688 = vmax.f32 %v557, %v684
        %v689 = vmax.f32 %v558, %v685
        %s690 = scalar_lea.vmem [#allocation5], 768
        %v691 = vld [vmem:[%s690] sm:$0xff]
        %v692 = vld [vmem:[%s690 + $0x8] sm:$0xff]
        %v693 = vld [vmem:[%s690 + $0x10] sm:$0xff]
        %v694 = vld [vmem:[%s690 + $0x18] sm:$0xff]
        %v695 = vld [vmem:[%s690 + $0x20] sm:$0xff]
        %v696 = vld [vmem:[%s690 + $0x28] sm:$0xff]
        %v697 = vld [vmem:[%s690 + $0x30] sm:$0xff]
        %v698 = vld [vmem:[%s690 + $0x38] sm:$0xff]
        %v699 = vld [vmem:[%s690 + $0x40] sm:$0xff]
        %v700 = vld [vmem:[%s690 + $0x48] sm:$0xff]
        %v701 = vld [vmem:[%s690 + $0x50] sm:$0xff]
        %v702 = vld [vmem:[%s690 + $0x58] sm:$0xff]
        %v703 = vld [vmem:[%s690 + $0x60] sm:$0xff]
        %v704 = vld [vmem:[%s690 + $0x68] sm:$0xff]
        %v705 = vld [vmem:[%s690 + $0x70] sm:$0xff]
        %v706 = vld [vmem:[%s690 + $0x78] sm:$0xff]
        %v707 = vld [vmem:[%s690 + $0x80] sm:$0xff]
        %v708 = vld [vmem:[%s690 + $0x88] sm:$0xff]
        %v709 = vld [vmem:[%s690 + $0x90] sm:$0xff]
        %v710 = vld [vmem:[%s690 + $0x98] sm:$0xff]
        %v711 = vld [vmem:[%s690 + $0xa0] sm:$0xff]
        %v712 = vld [vmem:[%s690 + $0xa8] sm:$0xff]
        %v713 = vld [vmem:[%s690 + $0xb0] sm:$0xff]
        %v714 = vld [vmem:[%s690 + $0xb8] sm:$0xff]
        %v715 = vld [vmem:[%s690 + $0xc0] sm:$0xff]
        %v716 = vld [vmem:[%s690 + $0xc8] sm:$0xff]
        %v717 = vld [vmem:[%s690 + $0xd0] sm:$0xff]
        %v718 = vld [vmem:[%s690 + $0xd8] sm:$0xff]
        %v719 = vld [vmem:[%s690 + $0xe0] sm:$0xff]
        %v720 = vld [vmem:[%s690 + $0xe8] sm:$0xff]
        %v721 = vld [vmem:[%s690 + $0xf0] sm:$0xff]
        %v722 = vld [vmem:[%s690 + $0xf8] sm:$0xff]
        %s723 = scalar_lea.vmem [#allocation7], 6
        %v724 = vld [vmem:[%s723] sm:$0x3]
        %v726 = vlaneseq
        %v727 = vshrl.u32 %v726, 7
        %v728 = vsub.s32 0, %v727
        %v729 = vrot.slane %v724, %v728
        %v730 = vlaneseq
        %v731 = vshrl.u32 %v730, 7
        %v732 = vsub.s32 1, %v731
        %v733 = vrot.slane %v724, %v732
        %736 = vmatprep.subr.mxu0 %v692
        %737 = vmatpush1.msra.mxu0 %v691
        %738 = vmatprep.subr.mxu0 %v694
        %739 = vmatpush1.msra.mxu0 %v693
        %740 = vmatprep.subr.mxu0 %v696
        %741 = vmatpush1.msra.mxu0 %v695
        %742 = vmatprep.subr.mxu0 %v698
        %743 = vmatpush1.msra.mxu0 %v697
        %744 = vmatprep.subr.mxu0 %v700
        %745 = vmatpush1.msra.mxu0 %v699
        %746 = vmatprep.subr.mxu0 %v702
        %747 = vmatpush1.msra.mxu0 %v701
        %748 = vmatprep.subr.mxu0 %v704
        %749 = vmatpush1.msra.mxu0 %v703
        %750 = vmatprep.subr.mxu0 %v706
        %751 = vmatpush1.msra.mxu0 %v705
        %752 = vmatprep.subr.mxu0 %v708
        %753 = vmatpush1.msra.mxu0 %v707
        %754 = vmatprep.subr.mxu0 %v710
        %755 = vmatpush1.msra.mxu0 %v709
        %756 = vmatprep.subr.mxu0 %v712
        %757 = vmatpush1.msra.mxu0 %v711
        %758 = vmatprep.subr.mxu0 %v714
        %759 = vmatpush1.msra.mxu0 %v713
        %760 = vmatprep.subr.mxu0 %v716
        %761 = vmatpush1.msra.mxu0 %v715
        %762 = vmatprep.subr.mxu0 %v718
        %763 = vmatpush1.msra.mxu0 %v717
        %764 = vmatprep.subr.mxu0 %v720
        %765 = vmatpush1.msra.mxu0 %v719
        %766 = vmatprep.subr.mxu0 %v722
        %767 = vmatpush1.msra.mxu0 %v721
        %768 = vmatprep.subr.mxu0 0.0
        %769 = vmatpush1.msra.mxu0 0.0
        %770 = vmatprep.subr.mxu0 0.0
        %771 = vmatpush1.msra.mxu0 0.0
        %772 = vmatprep.subr.mxu0 0.0
        %773 = vmatpush1.msra.mxu0 0.0
        %774 = vmatprep.subr.mxu0 0.0
        %775 = vmatpush1.msra.mxu0 0.0
        %776 = vmatprep.subr.mxu0 0.0
        %777 = vmatpush1.msra.mxu0 0.0
        %778 = vmatprep.subr.mxu0 0.0
        %779 = vmatpush1.msra.mxu0 0.0
        %780 = vmatprep.subr.mxu0 0.0
        %781 = vmatpush1.msra.mxu0 0.0
        %782 = vmatprep.subr.mxu0 0.0
        %783 = vmatpush1.msra.mxu0 0.0
        %784 = vmatprep.subr.mxu0 0.0
        %785 = vmatpush1.msra.mxu0 0.0
        %786 = vmatprep.subr.mxu0 0.0
        %787 = vmatpush1.msra.mxu0 0.0
        %788 = vmatprep.subr.mxu0 0.0
        %789 = vmatpush1.msra.mxu0 0.0
        %790 = vmatprep.subr.mxu0 0.0
        %791 = vmatpush1.msra.mxu0 0.0
        %792 = vmatprep.subr.mxu0 0.0
        %793 = vmatpush1.msra.mxu0 0.0
        %794 = vmatprep.subr.mxu0 0.0
        %795 = vmatpush1.msra.mxu0 0.0
        %796 = vmatprep.subr.mxu0 0.0
        %797 = vmatpush1.msra.mxu0 0.0
        %798 = vmatprep.subr.mxu0 0.0
        %799 = vmatpush1.msra.mxu0 0.0
        %800 = vmatprep.mubr.f32.mxu0 0.0
        %801 = vmatmul.mubr.f32.gmra.mrb[0].mxu0 %v301
        %v802 = vpop.f32.mrb[0].mxu0
        %v803 = vadd.f32 %v729, %v802
        %v804 = vpop.f32.mrb[0].mxu0
        %v805 = vadd.f32 %v733, %v804
        %806 = vmatprep.mubr.f32.mxu0 0.0
        %807 = vmatmul.mubr.f32.gmra.mrb[0].mxu0 %v302
        %v808 = vpop.f32.mrb[0].mxu0
        %v809 = vadd.f32 %v729, %v808
        %v810 = vpop.f32.mrb[0].mxu0
        %v811 = vadd.f32 %v733, %v810
        %812 = vdwg.mxu0
        %v813 = vmax.f32 %v803, 0.0
        %v814 = vmax.f32 %v805, 0.0
        %v815 = vmax.f32 %v809, 0.0
        %v816 = vmax.f32 %v811, 0.0
        %v817 = vmax.f32 %v686, %v813
        %v818 = vmax.f32 %v687, %v814
        %v819 = vmax.f32 %v688, %v815
        %v820 = vmax.f32 %v689, %v816
        %s821 = scalar_lea.vmem [#allocation5], 1024
        %v822 = vld [vmem:[%s821] sm:$0xff]
        %v823 = vld [vmem:[%s821 + $0x8] sm:$0xff]
        %v824 = vld [vmem:[%s821 + $0x10] sm:$0xff]
        %v825 = vld [vmem:[%s821 + $0x18] sm:$0xff]
        %v826 = vld [vmem:[%s821 + $0x20] sm:$0xff]
        %v827 = vld [vmem:[%s821 + $0x28] sm:$0xff]
        %v828 = vld [vmem:[%s821 + $0x30] sm:$0xff]
        %v829 = vld [vmem:[%s821 + $0x38] sm:$0xff]
        %v830 = vld [vmem:[%s821 + $0x40] sm:$0xff]
        %v831 = vld [vmem:[%s821 + $0x48] sm:$0xff]
        %v832 = vld [vmem:[%s821 + $0x50] sm:$0xff]
        %v833 = vld [vmem:[%s821 + $0x58] sm:$0xff]
        %v834 = vld [vmem:[%s821 + $0x60] sm:$0xff]
        %v835 = vld [vmem:[%s821 + $0x68] sm:$0xff]
        %v836 = vld [vmem:[%s821 + $0x70] sm:$0xff]
        %v837 = vld [vmem:[%s821 + $0x78] sm:$0xff]
        %v838 = vld [vmem:[%s821 + $0x80] sm:$0xff]
        %v839 = vld [vmem:[%s821 + $0x88] sm:$0xff]
        %v840 = vld [vmem:[%s821 + $0x90] sm:$0xff]
        %v841 = vld [vmem:[%s821 + $0x98] sm:$0xff]
        %v842 = vld [vmem:[%s821 + $0xa0] sm:$0xff]
        %v843 = vld [vmem:[%s821 + $0xa8] sm:$0xff]
        %v844 = vld [vmem:[%s821 + $0xb0] sm:$0xff]
        %v845 = vld [vmem:[%s821 + $0xb8] sm:$0xff]
        %v846 = vld [vmem:[%s821 + $0xc0] sm:$0xff]
        %v847 = vld [vmem:[%s821 + $0xc8] sm:$0xff]
        %v848 = vld [vmem:[%s821 + $0xd0] sm:$0xff]
        %v849 = vld [vmem:[%s821 + $0xd8] sm:$0xff]
        %v850 = vld [vmem:[%s821 + $0xe0] sm:$0xff]
        %v851 = vld [vmem:[%s821 + $0xe8] sm:$0xff]
        %v852 = vld [vmem:[%s821 + $0xf0] sm:$0xff]
        %v853 = vld [vmem:[%s821 + $0xf8] sm:$0xff]
        %s854 = scalar_lea.vmem [#allocation7], 8
        %v855 = vld [vmem:[%s854] sm:$0x3]
        %v857 = vlaneseq
        %v858 = vshrl.u32 %v857, 7
        %v859 = vsub.s32 0, %v858
        %v860 = vrot.slane %v855, %v859
        %v861 = vlaneseq
        %v862 = vshrl.u32 %v861, 7
        %v863 = vsub.s32 1, %v862
        %v864 = vrot.slane %v855, %v863
        %867 = vmatprep.subr.mxu0 %v823
        %868 = vmatpush1.msra.mxu0 %v822
        %869 = vmatprep.subr.mxu0 %v825
        %870 = vmatpush1.msra.mxu0 %v824
        %871 = vmatprep.subr.mxu0 %v827
        %872 = vmatpush1.msra.mxu0 %v826
        %873 = vmatprep.subr.mxu0 %v829
        %874 = vmatpush1.msra.mxu0 %v828
        %875 = vmatprep.subr.mxu0 %v831
        %876 = vmatpush1.msra.mxu0 %v830
        %877 = vmatprep.subr.mxu0 %v833
        %878 = vmatpush1.msra.mxu0 %v832
        %879 = vmatprep.subr.mxu0 %v835
        %880 = vmatpush1.msra.mxu0 %v834
        %881 = vmatprep.subr.mxu0 %v837
        %882 = vmatpush1.msra.mxu0 %v836
        %883 = vmatprep.subr.mxu0 %v839
        %884 = vmatpush1.msra.mxu0 %v838
        %885 = vmatprep.subr.mxu0 %v841
        %886 = vmatpush1.msra.mxu0 %v840
        %887 = vmatprep.subr.mxu0 %v843
        %888 = vmatpush1.msra.mxu0 %v842
        %889 = vmatprep.subr.mxu0 %v845
        %890 = vmatpush1.msra.mxu0 %v844
        %891 = vmatprep.subr.mxu0 %v847
        %892 = vmatpush1.msra.mxu0 %v846
        %893 = vmatprep.subr.mxu0 %v849
        %894 = vmatpush1.msra.mxu0 %v848
        %895 = vmatprep.subr.mxu0 %v851
        %896 = vmatpush1.msra.mxu0 %v850
        %897 = vmatprep.subr.mxu0 %v853
        %898 = vmatpush1.msra.mxu0 %v852
        %899 = vmatprep.subr.mxu0 0.0
        %900 = vmatpush1.msra.mxu0 0.0
        %901 = vmatprep.subr.mxu0 0.0
        %902 = vmatpush1.msra.mxu0 0.0
        %903 = vmatprep.subr.mxu0 0.0
        %904 = vmatpush1.msra.mxu0 0.0
        %905 = vmatprep.subr.mxu0 0.0
        %906 = vmatpush1.msra.mxu0 0.0
        %907 = vmatprep.subr.mxu0 0.0
        %908 = vmatpush1.msra.mxu0 0.0
        %909 = vmatprep.subr.mxu0 0.0
        %910 = vmatpush1.msra.mxu0 0.0
        %911 = vmatprep.subr.mxu0 0.0
        %912 = vmatpush1.msra.mxu0 0.0
        %913 = vmatprep.subr.mxu0 0.0
        %914 = vmatpush1.msra.mxu0 0.0
        %915 = vmatprep.subr.mxu0 0.0
        %916 = vmatpush1.msra.mxu0 0.0
        %917 = vmatprep.subr.mxu0 0.0
        %918 = vmatpush1.msra.mxu0 0.0
        %919 = vmatprep.subr.mxu0 0.0
        %920 = vmatpush1.msra.mxu0 0.0
        %921 = vmatprep.subr.mxu0 0.0
        %922 = vmatpush1.msra.mxu0 0.0
        %923 = vmatprep.subr.mxu0 0.0
        %924 = vmatpush1.msra.mxu0 0.0
        %925 = vmatprep.subr.mxu0 0.0
        %926 = vmatpush1.msra.mxu0 0.0
        %927 = vmatprep.subr.mxu0 0.0
        %928 = vmatpush1.msra.mxu0 0.0
        %929 = vmatprep.subr.mxu0 0.0
        %930 = vmatpush1.msra.mxu0 0.0
        %931 = vmatprep.mubr.f32.mxu0 0.0
        %932 = vmatmul.mubr.f32.gmra.mrb[0].mxu0 %v301
        %v933 = vpop.f32.mrb[0].mxu0
        %v934 = vadd.f32 %v860, %v933
        %v935 = vpop.f32.mrb[0].mxu0
        %v936 = vadd.f32 %v864, %v935
        %937 = vmatprep.mubr.f32.mxu0 0.0
        %938 = vmatmul.mubr.f32.gmra.mrb[0].mxu0 %v302
        %v939 = vpop.f32.mrb[0].mxu0
        %v940 = vadd.f32 %v860, %v939
        %v941 = vpop.f32.mrb[0].mxu0
        %v942 = vadd.f32 %v864, %v941
        %943 = vdwg.mxu0
        %v944 = vmax.f32 %v934, 0.0
        %v945 = vmax.f32 %v936, 0.0
        %v946 = vmax.f32 %v940, 0.0
        %v947 = vmax.f32 %v942, 0.0
        %v948 = vmax.f32 %v817, %v944
        %v949 = vmax.f32 %v818, %v945
        %v950 = vmax.f32 %v819, %v946
        %v951 = vmax.f32 %v820, %v947
        %s952 = scalar_lea.vmem [#allocation5], 1280
        %v953 = vld [vmem:[%s952] sm:$0xff]
        %v954 = vld [vmem:[%s952 + $0x8] sm:$0xff]
        %v955 = vld [vmem:[%s952 + $0x10] sm:$0xff]
        %v956 = vld [vmem:[%s952 + $0x18] sm:$0xff]
        %v957 = vld [vmem:[%s952 + $0x20] sm:$0xff]
        %v958 = vld [vmem:[%s952 + $0x28] sm:$0xff]
        %v959 = vld [vmem:[%s952 + $0x30] sm:$0xff]
        %v960 = vld [vmem:[%s952 + $0x38] sm:$0xff]
        %v961 = vld [vmem:[%s952 + $0x40] sm:$0xff]
        %v962 = vld [vmem:[%s952 + $0x48] sm:$0xff]
        %v963 = vld [vmem:[%s952 + $0x50] sm:$0xff]
        %v964 = vld [vmem:[%s952 + $0x58] sm:$0xff]
        %v965 = vld [vmem:[%s952 + $0x60] sm:$0xff]
        %v966 = vld [vmem:[%s952 + $0x68] sm:$0xff]
        %v967 = vld [vmem:[%s952 + $0x70] sm:$0xff]
        %v968 = vld [vmem:[%s952 + $0x78] sm:$0xff]
        %v969 = vld [vmem:[%s952 + $0x80] sm:$0xff]
        %v970 = vld [vmem:[%s952 + $0x88] sm:$0xff]
        %v971 = vld [vmem:[%s952 + $0x90] sm:$0xff]
        %v972 = vld [vmem:[%s952 + $0x98] sm:$0xff]
        %v973 = vld [vmem:[%s952 + $0xa0] sm:$0xff]
        %v974 = vld [vmem:[%s952 + $0xa8] sm:$0xff]
        %v975 = vld [vmem:[%s952 + $0xb0] sm:$0xff]
        %v976 = vld [vmem:[%s952 + $0xb8] sm:$0xff]
        %v977 = vld [vmem:[%s952 + $0xc0] sm:$0xff]
        %v978 = vld [vmem:[%s952 + $0xc8] sm:$0xff]
        %v979 = vld [vmem:[%s952 + $0xd0] sm:$0xff]
        %v980 = vld [vmem:[%s952 + $0xd8] sm:$0xff]
        %v981 = vld [vmem:[%s952 + $0xe0] sm:$0xff]
        %v982 = vld [vmem:[%s952 + $0xe8] sm:$0xff]
        %v983 = vld [vmem:[%s952 + $0xf0] sm:$0xff]
        %v984 = vld [vmem:[%s952 + $0xf8] sm:$0xff]
        %s985 = scalar_lea.vmem [#allocation7], 10
        %v986 = vld [vmem:[%s985] sm:$0x3]
        %v988 = vlaneseq
        %v989 = vshrl.u32 %v988, 7
        %v990 = vsub.s32 0, %v989
        %v991 = vrot.slane %v986, %v990
        %v992 = vlaneseq
        %v993 = vshrl.u32 %v992, 7
        %v994 = vsub.s32 1, %v993
        %v995 = vrot.slane %v986, %v994
        %998 = vmatprep.subr.mxu0 %v954
        %999 = vmatpush1.msra.mxu0 %v953
        %1000 = vmatprep.subr.mxu0 %v956
        %1001 = vmatpush1.msra.mxu0 %v955
        %1002 = vmatprep.subr.mxu0 %v958
        %1003 = vmatpush1.msra.mxu0 %v957
        %1004 = vmatprep.subr.mxu0 %v960
        %1005 = vmatpush1.msra.mxu0 %v959
        %1006 = vmatprep.subr.mxu0 %v962
        %1007 = vmatpush1.msra.mxu0 %v961
        %1008 = vmatprep.subr.mxu0 %v964
        %1009 = vmatpush1.msra.mxu0 %v963
        %1010 = vmatprep.subr.mxu0 %v966
        %1011 = vmatpush1.msra.mxu0 %v965
        %1012 = vmatprep.subr.mxu0 %v968
        %1013 = vmatpush1.msra.mxu0 %v967
        %1014 = vmatprep.subr.mxu0 %v970
        %1015 = vmatpush1.msra.mxu0 %v969
        %1016 = vmatprep.subr.mxu0 %v972
        %1017 = vmatpush1.msra.mxu0 %v971
        %1018 = vmatprep.subr.mxu0 %v974
        %1019 = vmatpush1.msra.mxu0 %v973
        %1020 = vmatprep.subr.mxu0 %v976
        %1021 = vmatpush1.msra.mxu0 %v975
        %1022 = vmatprep.subr.mxu0 %v978
        %1023 = vmatpush1.msra.mxu0 %v977
        %1024 = vmatprep.subr.mxu0 %v980
        %1025 = vmatpush1.msra.mxu0 %v979
        %1026 = vmatprep.subr.mxu0 %v982
        %1027 = vmatpush1.msra.mxu0 %v981
        %1028 = vmatprep.subr.mxu0 %v984
        %1029 = vmatpush1.msra.mxu0 %v983
        %1030 = vmatprep.subr.mxu0 0.0
        %1031 = vmatpush1.msra.mxu0 0.0
        %1032 = vmatprep.subr.mxu0 0.0
        %1033 = vmatpush1.msra.mxu0 0.0
        %1034 = vmatprep.subr.mxu0 0.0
        %1035 = vmatpush1.msra.mxu0 0.0
        %1036 = vmatprep.subr.mxu0 0.0
        %1037 = vmatpush1.msra.mxu0 0.0
        %1038 = vmatprep.subr.mxu0 0.0
        %1039 = vmatpush1.msra.mxu0 0.0
        %1040 = vmatprep.subr.mxu0 0.0
        %1041 = vmatpush1.msra.mxu0 0.0
        %1042 = vmatprep.subr.mxu0 0.0
        %1043 = vmatpush1.msra.mxu0 0.0
        %1044 = vmatprep.subr.mxu0 0.0
        %1045 = vmatpush1.msra.mxu0 0.0
        %1046 = vmatprep.subr.mxu0 0.0
        %1047 = vmatpush1.msra.mxu0 0.0
        %1048 = vmatprep.subr.mxu0 0.0
        %1049 = vmatpush1.msra.mxu0 0.0
        %1050 = vmatprep.subr.mxu0 0.0
        %1051 = vmatpush1.msra.mxu0 0.0
        %1052 = vmatprep.subr.mxu0 0.0
        %1053 = vmatpush1.msra.mxu0 0.0
        %1054 = vmatprep.subr.mxu0 0.0
        %1055 = vmatpush1.msra.mxu0 0.0
        %1056 = vmatprep.subr.mxu0 0.0
        %1057 = vmatpush1.msra.mxu0 0.0
        %1058 = vmatprep.subr.mxu0 0.0
        %1059 = vmatpush1.msra.mxu0 0.0
        %1060 = vmatprep.subr.mxu0 0.0
        %1061 = vmatpush1.msra.mxu0 0.0
        %1062 = vmatprep.mubr.f32.mxu0 0.0
        %1063 = vmatmul.mubr.f32.gmra.mrb[0].mxu0 %v301
        %v1064 = vpop.f32.mrb[0].mxu0
        %v1065 = vadd.f32 %v991, %v1064
        %v1066 = vpop.f32.mrb[0].mxu0
        %v1067 = vadd.f32 %v995, %v1066
        %1068 = vmatprep.mubr.f32.mxu0 0.0
        %1069 = vmatmul.mubr.f32.gmra.mrb[0].mxu0 %v302
        %v1070 = vpop.f32.mrb[0].mxu0
        %v1071 = vadd.f32 %v991, %v1070
        %v1072 = vpop.f32.mrb[0].mxu0
        %v1073 = vadd.f32 %v995, %v1072
        %1074 = vdwg.mxu0
        %v1075 = vmax.f32 %v1065, 0.0
        %v1076 = vmax.f32 %v1067, 0.0
        %v1077 = vmax.f32 %v1071, 0.0
        %v1078 = vmax.f32 %v1073, 0.0
        %v1079 = vmax.f32 %v948, %v1075
        %v1080 = vmax.f32 %v949, %v1076
        %v1081 = vmax.f32 %v950, %v1077
        %v1082 = vmax.f32 %v951, %v1078
        %s1083 = scalar_lea.vmem [#allocation5], 1536
        %v1084 = vld [vmem:[%s1083] sm:$0xff]
        %v1085 = vld [vmem:[%s1083 + $0x8] sm:$0xff]
        %v1086 = vld [vmem:[%s1083 + $0x10] sm:$0xff]
        %v1087 = vld [vmem:[%s1083 + $0x18] sm:$0xff]
        %v1088 = vld [vmem:[%s1083 + $0x20] sm:$0xff]
        %v1089 = vld [vmem:[%s1083 + $0x28] sm:$0xff]
        %v1090 = vld [vmem:[%s1083 + $0x30] sm:$0xff]
        %v1091 = vld [vmem:[%s1083 + $0x38] sm:$0xff]
        %v1092 = vld [vmem:[%s1083 + $0x40] sm:$0xff]
        %v1093 = vld [vmem:[%s1083 + $0x48] sm:$0xff]
        %v1094 = vld [vmem:[%s1083 + $0x50] sm:$0xff]
        %v1095 = vld [vmem:[%s1083 + $0x58] sm:$0xff]
        %v1096 = vld [vmem:[%s1083 + $0x60] sm:$0xff]
        %v1097 = vld [vmem:[%s1083 + $0x68] sm:$0xff]
        %v1098 = vld [vmem:[%s1083 + $0x70] sm:$0xff]
        %v1099 = vld [vmem:[%s1083 + $0x78] sm:$0xff]
        %v1100 = vld [vmem:[%s1083 + $0x80] sm:$0xff]
        %v1101 = vld [vmem:[%s1083 + $0x88] sm:$0xff]
        %v1102 = vld [vmem:[%s1083 + $0x90] sm:$0xff]
        %v1103 = vld [vmem:[%s1083 + $0x98] sm:$0xff]
        %v1104 = vld [vmem:[%s1083 + $0xa0] sm:$0xff]
        %v1105 = vld [vmem:[%s1083 + $0xa8] sm:$0xff]
        %v1106 = vld [vmem:[%s1083 + $0xb0] sm:$0xff]
        %v1107 = vld [vmem:[%s1083 + $0xb8] sm:$0xff]
        %v1108 = vld [vmem:[%s1083 + $0xc0] sm:$0xff]
        %v1109 = vld [vmem:[%s1083 + $0xc8] sm:$0xff]
        %v1110 = vld [vmem:[%s1083 + $0xd0] sm:$0xff]
        %v1111 = vld [vmem:[%s1083 + $0xd8] sm:$0xff]
        %v1112 = vld [vmem:[%s1083 + $0xe0] sm:$0xff]
        %v1113 = vld [vmem:[%s1083 + $0xe8] sm:$0xff]
        %v1114 = vld [vmem:[%s1083 + $0xf0] sm:$0xff]
        %v1115 = vld [vmem:[%s1083 + $0xf8] sm:$0xff]
        %s1116 = scalar_lea.vmem [#allocation7], 12
        %v1117 = vld [vmem:[%s1116] sm:$0x3]
        %v1119 = vlaneseq
        %v1120 = vshrl.u32 %v1119, 7
        %v1121 = vsub.s32 0, %v1120
        %v1122 = vrot.slane %v1117, %v1121
        %v1123 = vlaneseq
        %v1124 = vshrl.u32 %v1123, 7
        %v1125 = vsub.s32 1, %v1124
        %v1126 = vrot.slane %v1117, %v1125
        %1129 = vmatprep.subr.mxu0 %v1085
        %1130 = vmatpush1.msra.mxu0 %v1084
        %1131 = vmatprep.subr.mxu0 %v1087
        %1132 = vmatpush1.msra.mxu0 %v1086
        %1133 = vmatprep.subr.mxu0 %v1089
        %1134 = vmatpush1.msra.mxu0 %v1088
        %1135 = vmatprep.subr.mxu0 %v1091
        %1136 = vmatpush1.msra.mxu0 %v1090
        %1137 = vmatprep.subr.mxu0 %v1093
        %1138 = vmatpush1.msra.mxu0 %v1092
        %1139 = vmatprep.subr.mxu0 %v1095
        %1140 = vmatpush1.msra.mxu0 %v1094
        %1141 = vmatprep.subr.mxu0 %v1097
        %1142 = vmatpush1.msra.mxu0 %v1096
        %1143 = vmatprep.subr.mxu0 %v1099
        %1144 = vmatpush1.msra.mxu0 %v1098
        %1145 = vmatprep.subr.mxu0 %v1101
        %1146 = vmatpush1.msra.mxu0 %v1100
        %1147 = vmatprep.subr.mxu0 %v1103
        %1148 = vmatpush1.msra.mxu0 %v1102
        %1149 = vmatprep.subr.mxu0 %v1105
        %1150 = vmatpush1.msra.mxu0 %v1104
        %1151 = vmatprep.subr.mxu0 %v1107
        %1152 = vmatpush1.msra.mxu0 %v1106
        %1153 = vmatprep.subr.mxu0 %v1109
        %1154 = vmatpush1.msra.mxu0 %v1108
        %1155 = vmatprep.subr.mxu0 %v1111
        %1156 = vmatpush1.msra.mxu0 %v1110
        %1157 = vmatprep.subr.mxu0 %v1113
        %1158 = vmatpush1.msra.mxu0 %v1112
        %1159 = vmatprep.subr.mxu0 %v1115
        %1160 = vmatpush1.msra.mxu0 %v1114
        %1161 = vmatprep.subr.mxu0 0.0
        %1162 = vmatpush1.msra.mxu0 0.0
        %1163 = vmatprep.subr.mxu0 0.0
        %1164 = vmatpush1.msra.mxu0 0.0
        %1165 = vmatprep.subr.mxu0 0.0
        %1166 = vmatpush1.msra.mxu0 0.0
        %1167 = vmatprep.subr.mxu0 0.0
        %1168 = vmatpush1.msra.mxu0 0.0
        %1169 = vmatprep.subr.mxu0 0.0
        %1170 = vmatpush1.msra.mxu0 0.0
        %1171 = vmatprep.subr.mxu0 0.0
        %1172 = vmatpush1.msra.mxu0 0.0
        %1173 = vmatprep.subr.mxu0 0.0
        %1174 = vmatpush1.msra.mxu0 0.0
        %1175 = vmatprep.subr.mxu0 0.0
        %1176 = vmatpush1.msra.mxu0 0.0
        %1177 = vmatprep.subr.mxu0 0.0
        %1178 = vmatpush1.msra.mxu0 0.0
        %1179 = vmatprep.subr.mxu0 0.0
        %1180 = vmatpush1.msra.mxu0 0.0
        %1181 = vmatprep.subr.mxu0 0.0
        %1182 = vmatpush1.msra.mxu0 0.0
        %1183 = vmatprep.subr.mxu0 0.0
        %1184 = vmatpush1.msra.mxu0 0.0
        %1185 = vmatprep.subr.mxu0 0.0
        %1186 = vmatpush1.msra.mxu0 0.0
        %1187 = vmatprep.subr.mxu0 0.0
        %1188 = vmatpush1.msra.mxu0 0.0
        %1189 = vmatprep.subr.mxu0 0.0
        %1190 = vmatpush1.msra.mxu0 0.0
        %1191 = vmatprep.subr.mxu0 0.0
        %1192 = vmatpush1.msra.mxu0 0.0
        %1193 = vmatprep.mubr.f32.mxu0 0.0
        %1194 = vmatmul.mubr.f32.gmra.mrb[0].mxu0 %v301
        %v1195 = vpop.f32.mrb[0].mxu0
        %v1196 = vadd.f32 %v1122, %v1195
        %v1197 = vpop.f32.mrb[0].mxu0
        %v1198 = vadd.f32 %v1126, %v1197
        %1199 = vmatprep.mubr.f32.mxu0 0.0
        %1200 = vmatmul.mubr.f32.gmra.mrb[0].mxu0 %v302
        %v1201 = vpop.f32.mrb[0].mxu0
        %v1202 = vadd.f32 %v1122, %v1201
        %v1203 = vpop.f32.mrb[0].mxu0
        %v1204 = vadd.f32 %v1126, %v1203
        %1205 = vdwg.mxu0
        %v1206 = vmax.f32 %v1196, 0.0
        %v1207 = vmax.f32 %v1198, 0.0
        %v1208 = vmax.f32 %v1202, 0.0
        %v1209 = vmax.f32 %v1204, 0.0
        %v1210 = vmax.f32 %v1079, %v1206
        %v1211 = vmax.f32 %v1080, %v1207
        %v1212 = vmax.f32 %v1081, %v1208
        %v1213 = vmax.f32 %v1082, %v1209
        %s1214 = scalar_lea.vmem [#allocation5], 1792
        %v1215 = vld [vmem:[%s1214] sm:$0xff]
        %v1216 = vld [vmem:[%s1214 + $0x8] sm:$0xff]
        %v1217 = vld [vmem:[%s1214 + $0x10] sm:$0xff]
        %v1218 = vld [vmem:[%s1214 + $0x18] sm:$0xff]
        %v1219 = vld [vmem:[%s1214 + $0x20] sm:$0xff]
        %v1220 = vld [vmem:[%s1214 + $0x28] sm:$0xff]
        %v1221 = vld [vmem:[%s1214 + $0x30] sm:$0xff]
        %v1222 = vld [vmem:[%s1214 + $0x38] sm:$0xff]
        %v1223 = vld [vmem:[%s1214 + $0x40] sm:$0xff]
        %v1224 = vld [vmem:[%s1214 + $0x48] sm:$0xff]
        %v1225 = vld [vmem:[%s1214 + $0x50] sm:$0xff]
        %v1226 = vld [vmem:[%s1214 + $0x58] sm:$0xff]
        %v1227 = vld [vmem:[%s1214 + $0x60] sm:$0xff]
        %v1228 = vld [vmem:[%s1214 + $0x68] sm:$0xff]
        %v1229 = vld [vmem:[%s1214 + $0x70] sm:$0xff]
        %v1230 = vld [vmem:[%s1214 + $0x78] sm:$0xff]
        %v1231 = vld [vmem:[%s1214 + $0x80] sm:$0xff]
        %v1232 = vld [vmem:[%s1214 + $0x88] sm:$0xff]
        %v1233 = vld [vmem:[%s1214 + $0x90] sm:$0xff]
        %v1234 = vld [vmem:[%s1214 + $0x98] sm:$0xff]
        %v1235 = vld [vmem:[%s1214 + $0xa0] sm:$0xff]
        %v1236 = vld [vmem:[%s1214 + $0xa8] sm:$0xff]
        %v1237 = vld [vmem:[%s1214 + $0xb0] sm:$0xff]
        %v1238 = vld [vmem:[%s1214 + $0xb8] sm:$0xff]
        %v1239 = vld [vmem:[%s1214 + $0xc0] sm:$0xff]
        %v1240 = vld [vmem:[%s1214 + $0xc8] sm:$0xff]
        %v1241 = vld [vmem:[%s1214 + $0xd0] sm:$0xff]
        %v1242 = vld [vmem:[%s1214 + $0xd8] sm:$0xff]
        %v1243 = vld [vmem:[%s1214 + $0xe0] sm:$0xff]
        %v1244 = vld [vmem:[%s1214 + $0xe8] sm:$0xff]
        %v1245 = vld [vmem:[%s1214 + $0xf0] sm:$0xff]
        %v1246 = vld [vmem:[%s1214 + $0xf8] sm:$0xff]
        %s1247 = scalar_lea.vmem [#allocation7], 14
        %v1248 = vld [vmem:[%s1247] sm:$0x3]
        %v1250 = vlaneseq
        %v1251 = vshrl.u32 %v1250, 7
        %v1252 = vsub.s32 0, %v1251
        %v1253 = vrot.slane %v1248, %v1252
        %v1254 = vlaneseq
        %v1255 = vshrl.u32 %v1254, 7
        %v1256 = vsub.s32 1, %v1255
        %v1257 = vrot.slane %v1248, %v1256
        %1260 = vmatprep.subr.mxu0 %v1216
        %1261 = vmatpush1.msra.mxu0 %v1215
        %1262 = vmatprep.subr.mxu0 %v1218
        %1263 = vmatpush1.msra.mxu0 %v1217
        %1264 = vmatprep.subr.mxu0 %v1220
        %1265 = vmatpush1.msra.mxu0 %v1219
        %1266 = vmatprep.subr.mxu0 %v1222
        %1267 = vmatpush1.msra.mxu0 %v1221
        %1268 = vmatprep.subr.mxu0 %v1224
        %1269 = vmatpush1.msra.mxu0 %v1223
        %1270 = vmatprep.subr.mxu0 %v1226
        %1271 = vmatpush1.msra.mxu0 %v1225
        %1272 = vmatprep.subr.mxu0 %v1228
        %1273 = vmatpush1.msra.mxu0 %v1227
        %1274 = vmatprep.subr.mxu0 %v1230
        %1275 = vmatpush1.msra.mxu0 %v1229
        %1276 = vmatprep.subr.mxu0 %v1232
        %1277 = vmatpush1.msra.mxu0 %v1231
        %1278 = vmatprep.subr.mxu0 %v1234
        %1279 = vmatpush1.msra.mxu0 %v1233
        %1280 = vmatprep.subr.mxu0 %v1236
        %1281 = vmatpush1.msra.mxu0 %v1235
        %1282 = vmatprep.subr.mxu0 %v1238
        %1283 = vmatpush1.msra.mxu0 %v1237
        %1284 = vmatprep.subr.mxu0 %v1240
        %1285 = vmatpush1.msra.mxu0 %v1239
        %1286 = vmatprep.subr.mxu0 %v1242
        %1287 = vmatpush1.msra.mxu0 %v1241
        %1288 = vmatprep.subr.mxu0 %v1244
        %1289 = vmatpush1.msra.mxu0 %v1243
        %1290 = vmatprep.subr.mxu0 %v1246
        %1291 = vmatpush1.msra.mxu0 %v1245
        %1292 = vmatprep.subr.mxu0 0.0
        %1293 = vmatpush1.msra.mxu0 0.0
        %1294 = vmatprep.subr.mxu0 0.0
        %1295 = vmatpush1.msra.mxu0 0.0
        %1296 = vmatprep.subr.mxu0 0.0
        %1297 = vmatpush1.msra.mxu0 0.0
        %1298 = vmatprep.subr.mxu0 0.0
        %1299 = vmatpush1.msra.mxu0 0.0
        %1300 = vmatprep.subr.mxu0 0.0
        %1301 = vmatpush1.msra.mxu0 0.0
        %1302 = vmatprep.subr.mxu0 0.0
        %1303 = vmatpush1.msra.mxu0 0.0
        %1304 = vmatprep.subr.mxu0 0.0
        %1305 = vmatpush1.msra.mxu0 0.0
        %1306 = vmatprep.subr.mxu0 0.0
        %1307 = vmatpush1.msra.mxu0 0.0
        %1308 = vmatprep.subr.mxu0 0.0
        %1309 = vmatpush1.msra.mxu0 0.0
        %1310 = vmatprep.subr.mxu0 0.0
        %1311 = vmatpush1.msra.mxu0 0.0
        %1312 = vmatprep.subr.mxu0 0.0
        %1313 = vmatpush1.msra.mxu0 0.0
        %1314 = vmatprep.subr.mxu0 0.0
        %1315 = vmatpush1.msra.mxu0 0.0
        %1316 = vmatprep.subr.mxu0 0.0
        %1317 = vmatpush1.msra.mxu0 0.0
        %1318 = vmatprep.subr.mxu0 0.0
        %1319 = vmatpush1.msra.mxu0 0.0
        %1320 = vmatprep.subr.mxu0 0.0
        %1321 = vmatpush1.msra.mxu0 0.0
        %1322 = vmatprep.subr.mxu0 0.0
        %1323 = vmatpush1.msra.mxu0 0.0
        %1324 = vmatprep.mubr.f32.mxu0 0.0
        %1325 = vmatmul.mubr.f32.gmra.mrb[0].mxu0 %v301
        %v1326 = vpop.f32.mrb[0].mxu0
        %v1327 = vadd.f32 %v1253, %v1326
        %v1328 = vpop.f32.mrb[0].mxu0
        %v1329 = vadd.f32 %v1257, %v1328
        %1330 = vmatprep.mubr.f32.mxu0 0.0
        %1331 = vmatmul.mubr.f32.gmra.mrb[0].mxu0 %v302
        %v1332 = vpop.f32.mrb[0].mxu0
        %v1333 = vadd.f32 %v1253, %v1332
        %v1334 = vpop.f32.mrb[0].mxu0
        %v1335 = vadd.f32 %v1257, %v1334
        %1336 = vdwg.mxu0
        %v1337 = vmax.f32 %v1327, 0.0
        %v1338 = vmax.f32 %v1329, 0.0
        %v1339 = vmax.f32 %v1333, 0.0
        %v1340 = vmax.f32 %v1335, 0.0
        %v1341 = vmax.f32 %v1210, %v1337
        %v1342 = vmax.f32 %v1211, %v1338
        %v1343 = vmax.f32 %v1212, %v1339
        %v1344 = vmax.f32 %v1213, %v1340
        %s1345 = scalar_lea.vmem [#allocation5], 2048
        %v1346 = vld [vmem:[%s1345] sm:$0xff]
        %v1347 = vld [vmem:[%s1345 + $0x8] sm:$0xff]
        %v1348 = vld [vmem:[%s1345 + $0x10] sm:$0xff]
        %v1349 = vld [vmem:[%s1345 + $0x18] sm:$0xff]
        %v1350 = vld [vmem:[%s1345 + $0x20] sm:$0xff]
        %v1351 = vld [vmem:[%s1345 + $0x28] sm:$0xff]
        %v1352 = vld [vmem:[%s1345 + $0x30] sm:$0xff]
        %v1353 = vld [vmem:[%s1345 + $0x38] sm:$0xff]
        %v1354 = vld [vmem:[%s1345 + $0x40] sm:$0xff]
        %v1355 = vld [vmem:[%s1345 + $0x48] sm:$0xff]
        %v1356 = vld [vmem:[%s1345 + $0x50] sm:$0xff]
        %v1357 = vld [vmem:[%s1345 + $0x58] sm:$0xff]
        %v1358 = vld [vmem:[%s1345 + $0x60] sm:$0xff]
        %v1359 = vld [vmem:[%s1345 + $0x68] sm:$0xff]
        %v1360 = vld [vmem:[%s1345 + $0x70] sm:$0xff]
        %v1361 = vld [vmem:[%s1345 + $0x78] sm:$0xff]
        %v1362 = vld [vmem:[%s1345 + $0x80] sm:$0xff]
        %v1363 = vld [vmem:[%s1345 + $0x88] sm:$0xff]
        %v1364 = vld [vmem:[%s1345 + $0x90] sm:$0xff]
        %v1365 = vld [vmem:[%s1345 + $0x98] sm:$0xff]
        %v1366 = vld [vmem:[%s1345 + $0xa0] sm:$0xff]
        %v1367 = vld [vmem:[%s1345 + $0xa8] sm:$0xff]
        %v1368 = vld [vmem:[%s1345 + $0xb0] sm:$0xff]
        %v1369 = vld [vmem:[%s1345 + $0xb8] sm:$0xff]
        %v1370 = vld [vmem:[%s1345 + $0xc0] sm:$0xff]
        %v1371 = vld [vmem:[%s1345 + $0xc8] sm:$0xff]
        %v1372 = vld [vmem:[%s1345 + $0xd0] sm:$0xff]
        %v1373 = vld [vmem:[%s1345 + $0xd8] sm:$0xff]
        %v1374 = vld [vmem:[%s1345 + $0xe0] sm:$0xff]
        %v1375 = vld [vmem:[%s1345 + $0xe8] sm:$0xff]
        %v1376 = vld [vmem:[%s1345 + $0xf0] sm:$0xff]
        %v1377 = vld [vmem:[%s1345 + $0xf8] sm:$0xff]
        %s1378 = scalar_lea.vmem [#allocation7], 16
        %v1379 = vld [vmem:[%s1378] sm:$0x3]
        %v1381 = vlaneseq
        %v1382 = vshrl.u32 %v1381, 7
        %v1383 = vsub.s32 0, %v1382
        %v1384 = vrot.slane %v1379, %v1383
        %v1385 = vlaneseq
        %v1386 = vshrl.u32 %v1385, 7
        %v1387 = vsub.s32 1, %v1386
        %v1388 = vrot.slane %v1379, %v1387
        %1391 = vmatprep.subr.mxu0 %v1347
        %1392 = vmatpush1.msra.mxu0 %v1346
        %1393 = vmatprep.subr.mxu0 %v1349
        %1394 = vmatpush1.msra.mxu0 %v1348
        %1395 = vmatprep.subr.mxu0 %v1351
        %1396 = vmatpush1.msra.mxu0 %v1350
        %1397 = vmatprep.subr.mxu0 %v1353
        %1398 = vmatpush1.msra.mxu0 %v1352
        %1399 = vmatprep.subr.mxu0 %v1355
        %1400 = vmatpush1.msra.mxu0 %v1354
        %1401 = vmatprep.subr.mxu0 %v1357
        %1402 = vmatpush1.msra.mxu0 %v1356
        %1403 = vmatprep.subr.mxu0 %v1359
        %1404 = vmatpush1.msra.mxu0 %v1358
        %1405 = vmatprep.subr.mxu0 %v1361
        %1406 = vmatpush1.msra.mxu0 %v1360
        %1407 = vmatprep.subr.mxu0 %v1363
        %1408 = vmatpush1.msra.mxu0 %v1362
        %1409 = vmatprep.subr.mxu0 %v1365
        %1410 = vmatpush1.msra.mxu0 %v1364
        %1411 = vmatprep.subr.mxu0 %v1367
        %1412 = vmatpush1.msra.mxu0 %v1366
        %1413 = vmatprep.subr.mxu0 %v1369
        %1414 = vmatpush1.msra.mxu0 %v1368
        %1415 = vmatprep.subr.mxu0 %v1371
        %1416 = vmatpush1.msra.mxu0 %v1370
        %1417 = vmatprep.subr.mxu0 %v1373
        %1418 = vmatpush1.msra.mxu0 %v1372
        %1419 = vmatprep.subr.mxu0 %v1375
        %1420 = vmatpush1.msra.mxu0 %v1374
        %1421 = vmatprep.subr.mxu0 %v1377
        %1422 = vmatpush1.msra.mxu0 %v1376
        %1423 = vmatprep.subr.mxu0 0.0
        %1424 = vmatpush1.msra.mxu0 0.0
        %1425 = vmatprep.subr.mxu0 0.0
        %1426 = vmatpush1.msra.mxu0 0.0
        %1427 = vmatprep.subr.mxu0 0.0
        %1428 = vmatpush1.msra.mxu0 0.0
        %1429 = vmatprep.subr.mxu0 0.0
        %1430 = vmatpush1.msra.mxu0 0.0
        %1431 = vmatprep.subr.mxu0 0.0
        %1432 = vmatpush1.msra.mxu0 0.0
        %1433 = vmatprep.subr.mxu0 0.0
        %1434 = vmatpush1.msra.mxu0 0.0
        %1435 = vmatprep.subr.mxu0 0.0
        %1436 = vmatpush1.msra.mxu0 0.0
        %1437 = vmatprep.subr.mxu0 0.0
        %1438 = vmatpush1.msra.mxu0 0.0
        %1439 = vmatprep.subr.mxu0 0.0
        %1440 = vmatpush1.msra.mxu0 0.0
        %1441 = vmatprep.subr.mxu0 0.0
        %1442 = vmatpush1.msra.mxu0 0.0
        %1443 = vmatprep.subr.mxu0 0.0
        %1444 = vmatpush1.msra.mxu0 0.0
        %1445 = vmatprep.subr.mxu0 0.0
        %1446 = vmatpush1.msra.mxu0 0.0
        %1447 = vmatprep.subr.mxu0 0.0
        %1448 = vmatpush1.msra.mxu0 0.0
        %1449 = vmatprep.subr.mxu0 0.0
        %1450 = vmatpush1.msra.mxu0 0.0
        %1451 = vmatprep.subr.mxu0 0.0
        %1452 = vmatpush1.msra.mxu0 0.0
        %1453 = vmatprep.subr.mxu0 0.0
        %1454 = vmatpush1.msra.mxu0 0.0
        %1455 = vmatprep.mubr.f32.mxu0 0.0
        %1456 = vmatmul.mubr.f32.gmra.mrb[0].mxu0 %v301
        %v1457 = vpop.f32.mrb[0].mxu0
        %v1458 = vadd.f32 %v1384, %v1457
        %v1459 = vpop.f32.mrb[0].mxu0
        %v1460 = vadd.f32 %v1388, %v1459
        %1461 = vmatprep.mubr.f32.mxu0 0.0
        %1462 = vmatmul.mubr.f32.gmra.mrb[0].mxu0 %v302
        %v1463 = vpop.f32.mrb[0].mxu0
        %v1464 = vadd.f32 %v1384, %v1463
        %v1465 = vpop.f32.mrb[0].mxu0
        %v1466 = vadd.f32 %v1388, %v1465
        %1467 = vdwg.mxu0
        %v1468 = vmax.f32 %v1458, 0.0
        %v1469 = vmax.f32 %v1460, 0.0
        %v1470 = vmax.f32 %v1464, 0.0
        %v1471 = vmax.f32 %v1466, 0.0
        %v1472 = vmax.f32 %v1341, %v1468
        %v1473 = vmax.f32 %v1342, %v1469
        %v1474 = vmax.f32 %v1343, %v1470
        %v1475 = vmax.f32 %v1344, %v1471
        %v1476 = vld [vmem:[#allocation8] sm:$0xff]
        %v1477 = vld [vmem:[#allocation8 + $0x8] sm:$0xff]
        %v1478 = vld [vmem:[#allocation8 + $0x10] sm:$0xff]
        %v1479 = vld [vmem:[#allocation8 + $0x18] sm:$0xff]
        %v1480 = vld [vmem:[#allocation8 + $0x20] sm:$0xff]
        %v1481 = vld [vmem:[#allocation8 + $0x28] sm:$0xff]
        %v1482 = vld [vmem:[#allocation8 + $0x30] sm:$0xff]
        %v1483 = vld [vmem:[#allocation8 + $0x38] sm:$0xff]
        %v1484 = vld [vmem:[#allocation8 + $0x40] sm:$0xff]
        %v1485 = vld [vmem:[#allocation8 + $0x48] sm:$0xff]
        %v1486 = vld [vmem:[#allocation8 + $0x50] sm:$0xff]
        %v1487 = vld [vmem:[#allocation8 + $0x58] sm:$0xff]
        %v1488 = vld [vmem:[#allocation8 + $0x60] sm:$0xff]
        %v1489 = vld [vmem:[#allocation8 + $0x68] sm:$0xff]
        %v1490 = vld [vmem:[#allocation8 + $0x70] sm:$0xff]
        %v1491 = vld [vmem:[#allocation8 + $0x78] sm:$0xff]
        %v1492 = vld [vmem:[#allocation8 + $0x80] sm:$0xff]
        %v1493 = vld [vmem:[#allocation8 + $0x88] sm:$0xff]
        %v1494 = vld [vmem:[#allocation8 + $0x90] sm:$0xff]
        %v1495 = vld [vmem:[#allocation8 + $0x98] sm:$0xff]
        %v1496 = vld [vmem:[#allocation8 + $0xa0] sm:$0xff]
        %v1497 = vld [vmem:[#allocation8 + $0xa8] sm:$0xff]
        %v1498 = vld [vmem:[#allocation8 + $0xb0] sm:$0xff]
        %v1499 = vld [vmem:[#allocation8 + $0xb8] sm:$0xff]
        %v1500 = vld [vmem:[#allocation8 + $0xc0] sm:$0xff]
        %v1501 = vld [vmem:[#allocation8 + $0xc8] sm:$0xff]
        %v1502 = vld [vmem:[#allocation8 + $0xd0] sm:$0xff]
        %v1503 = vld [vmem:[#allocation8 + $0xd8] sm:$0xff]
        %v1504 = vld [vmem:[#allocation8 + $0xe0] sm:$0xff]
        %v1505 = vld [vmem:[#allocation8 + $0xe8] sm:$0xff]
        %v1506 = vld [vmem:[#allocation8 + $0xf0] sm:$0xff]
        %v1507 = vld [vmem:[#allocation8 + $0xf8] sm:$0xff]
        %v1508 = vld [vmem:[#allocation8 + $0x100] sm:$0xff]
        %v1509 = vld [vmem:[#allocation8 + $0x108] sm:$0xff]
        %v1510 = vld [vmem:[#allocation8 + $0x110] sm:$0xff]
        %v1511 = vld [vmem:[#allocation8 + $0x118] sm:$0xff]
        %v1512 = vld [vmem:[#allocation8 + $0x120] sm:$0xff]
        %v1513 = vld [vmem:[#allocation8 + $0x128] sm:$0xff]
        %v1514 = vld [vmem:[#allocation8 + $0x130] sm:$0xff]
        %v1515 = vld [vmem:[#allocation8 + $0x138] sm:$0xff]
        %v1516 = vld [vmem:[#allocation8 + $0x140] sm:$0xff]
        %v1517 = vld [vmem:[#allocation8 + $0x148] sm:$0xff]
        %v1518 = vld [vmem:[#allocation8 + $0x150] sm:$0xff]
        %v1519 = vld [vmem:[#allocation8 + $0x158] sm:$0xff]
        %v1520 = vld [vmem:[#allocation8 + $0x160] sm:$0xff]
        %v1521 = vld [vmem:[#allocation8 + $0x168] sm:$0xff]
        %v1522 = vld [vmem:[#allocation8 + $0x170] sm:$0xff]
        %v1523 = vld [vmem:[#allocation8 + $0x178] sm:$0xff]
        %v1524 = vld [vmem:[#allocation8 + $0x180] sm:$0xff]
        %v1525 = vld [vmem:[#allocation8 + $0x188] sm:$0xff]
        %v1526 = vld [vmem:[#allocation8 + $0x190] sm:$0xff]
        %v1527 = vld [vmem:[#allocation8 + $0x198] sm:$0xff]
        %v1528 = vld [vmem:[#allocation8 + $0x1a0] sm:$0xff]
        %v1529 = vld [vmem:[#allocation8 + $0x1a8] sm:$0xff]
        %v1530 = vld [vmem:[#allocation8 + $0x1b0] sm:$0xff]
        %v1531 = vld [vmem:[#allocation8 + $0x1b8] sm:$0xff]
        %v1532 = vld [vmem:[#allocation8 + $0x1c0] sm:$0xff]
        %v1533 = vld [vmem:[#allocation8 + $0x1c8] sm:$0xff]
        %v1534 = vld [vmem:[#allocation8 + $0x1d0] sm:$0xff]
        %v1535 = vld [vmem:[#allocation8 + $0x1d8] sm:$0xff]
        %v1536 = vld [vmem:[#allocation8 + $0x1e0] sm:$0xff]
        %v1537 = vld [vmem:[#allocation8 + $0x1e8] sm:$0xff]
        %v1538 = vld [vmem:[#allocation8 + $0x1f0] sm:$0xff]
        %v1539 = vld [vmem:[#allocation8 + $0x1f8] sm:$0xff]
        %v1540 = vld [vmem:[#allocation10] sm:$0x3]
        %v1542 = vlaneseq
        %v1543 = vshrl.u32 %v1542, 7
        %v1544 = vsub.s32 0, %v1543
        %v1545 = vrot.slane %v1540, %v1544
        %v1546 = vlaneseq
        %v1547 = vshrl.u32 %v1546, 7
        %v1548 = vsub.s32 1, %v1547
        %v1549 = vrot.slane %v1540, %v1548
        %1552 = vmatprep.subr.mxu0 %v1477
        %1553 = vmatpush1.msra.mxu0 %v1476
        %1554 = vmatprep.subr.mxu0 %v1479
        %1555 = vmatpush1.msra.mxu0 %v1478
        %1556 = vmatprep.subr.mxu0 %v1481
        %1557 = vmatpush1.msra.mxu0 %v1480
        %1558 = vmatprep.subr.mxu0 %v1483
        %1559 = vmatpush1.msra.mxu0 %v1482
        %1560 = vmatprep.subr.mxu0 %v1485
        %1561 = vmatpush1.msra.mxu0 %v1484
        %1562 = vmatprep.subr.mxu0 %v1487
        %1563 = vmatpush1.msra.mxu0 %v1486
        %1564 = vmatprep.subr.mxu0 %v1489
        %1565 = vmatpush1.msra.mxu0 %v1488
        %1566 = vmatprep.subr.mxu0 %v1491
        %1567 = vmatpush1.msra.mxu0 %v1490
        %1568 = vmatprep.subr.mxu0 %v1493
        %1569 = vmatpush1.msra.mxu0 %v1492
        %1570 = vmatprep.subr.mxu0 %v1495
        %1571 = vmatpush1.msra.mxu0 %v1494
        %1572 = vmatprep.subr.mxu0 %v1497
        %1573 = vmatpush1.msra.mxu0 %v1496
        %1574 = vmatprep.subr.mxu0 %v1499
        %1575 = vmatpush1.msra.mxu0 %v1498
        %1576 = vmatprep.subr.mxu0 %v1501
        %1577 = vmatpush1.msra.mxu0 %v1500
        %1578 = vmatprep.subr.mxu0 %v1503
        %1579 = vmatpush1.msra.mxu0 %v1502
        %1580 = vmatprep.subr.mxu0 %v1505
        %1581 = vmatpush1.msra.mxu0 %v1504
        %1582 = vmatprep.subr.mxu0 %v1507
        %1583 = vmatpush1.msra.mxu0 %v1506
        %1584 = vmatprep.subr.mxu0 %v1509
        %1585 = vmatpush1.msra.mxu0 %v1508
        %1586 = vmatprep.subr.mxu0 %v1511
        %1587 = vmatpush1.msra.mxu0 %v1510
        %1588 = vmatprep.subr.mxu0 %v1513
        %1589 = vmatpush1.msra.mxu0 %v1512
        %1590 = vmatprep.subr.mxu0 %v1515
        %1591 = vmatpush1.msra.mxu0 %v1514
        %1592 = vmatprep.subr.mxu0 %v1517
        %1593 = vmatpush1.msra.mxu0 %v1516
        %1594 = vmatprep.subr.mxu0 %v1519
        %1595 = vmatpush1.msra.mxu0 %v1518
        %1596 = vmatprep.subr.mxu0 %v1521
        %1597 = vmatpush1.msra.mxu0 %v1520
        %1598 = vmatprep.subr.mxu0 %v1523
        %1599 = vmatpush1.msra.mxu0 %v1522
        %1600 = vmatprep.subr.mxu0 %v1525
        %1601 = vmatpush1.msra.mxu0 %v1524
        %1602 = vmatprep.subr.mxu0 %v1527
        %1603 = vmatpush1.msra.mxu0 %v1526
        %1604 = vmatprep.subr.mxu0 %v1529
        %1605 = vmatpush1.msra.mxu0 %v1528
        %1606 = vmatprep.subr.mxu0 %v1531
        %1607 = vmatpush1.msra.mxu0 %v1530
        %1608 = vmatprep.subr.mxu0 %v1533
        %1609 = vmatpush1.msra.mxu0 %v1532
        %1610 = vmatprep.subr.mxu0 %v1535
        %1611 = vmatpush1.msra.mxu0 %v1534
        %1612 = vmatprep.subr.mxu0 %v1537
        %1613 = vmatpush1.msra.mxu0 %v1536
        %1614 = vmatprep.subr.mxu0 %v1539
        %1615 = vmatpush1.msra.mxu0 %v1538
        %1616 = vmatprep.mubr.f32.mxu0 %v1473
        %1617 = vmatmul.mubr.f32.gmra.mrb[0].mxu0 %v1472
        %v1618 = vpop.f32.mrb[0].mxu0
        %v1619 = vadd.f32 %v1545, %v1618
        %v1620 = vpop.f32.mrb[0].mxu0
        %v1621 = vadd.f32 %v1549, %v1620
        %1622 = vmatprep.mubr.f32.mxu0 %v1475
        %1623 = vmatmul.mubr.f32.gmra.mrb[0].mxu0 %v1474
        %v1624 = vpop.f32.mrb[0].mxu0
        %v1625 = vadd.f32 %v1545, %v1624
        %v1626 = vpop.f32.mrb[0].mxu0
        %v1627 = vadd.f32 %v1549, %v1626
        %1628 = vdwg.mxu0
        %v1629 = vxor.u32 %v1619, 2147483648
        %v1630 = vxor.u32 %v1625, 2147483648
        %v1631 = vmul.f32 %v1629, 1.442695
        %v1632 = vpow.pop %v1631
        %v1633 = vmul.f32 %v1630, 1.442695
        %v1634 = vpow.pop %v1633
        %v1635 = vadd.f32 %v1632, 1.0
        %v1636 = vadd.f32 %v1634, 1.0
        %v1637 = vrcp.pop %v1635
        %v1638 = vmul.f32 1.0, %v1637
        %v1639 = vrcp.pop %v1636
        %v1640 = vmul.f32 1.0, %v1639
        %v1641 = vmax.f32 %v1621, 0.0
        %v1642 = vmax.f32 %v1627, 0.0
        %v1643 = vmul.f32 %v1638, %v1641
        %v1644 = vmul.f32 %v1640, %v1642
        %v1645 = vsub.f32 1.0, %v1638
        %v1646 = vsub.f32 1.0, %v1640
        %v1647 = vmul.f32 %v1645, %v1472
        %v1648 = vmul.f32 %v1646, %v1474
        %v1649 = vadd.f32 %v1643, %v1647
        %v1650 = vadd.f32 %v1644, %v1648
        %1651 = vst [vmem:[%s298] sm:$0xff] %v1649
        %1652 = vst [vmem:[%s298 + $0x8] sm:$0xff] %v1650
        %s1653 = sand.u32 %s142, 1
        %s1654 = scalar_lea.sflag [#allocation4], %s1653
        %s1655 = sand.u32 %s142, 1
        %s1656 = smul.addr %s1655, 16
        %s1657 = scalar_lea.vmem [#allocation11], %s1656
        // Predicated region
        $region61: #{tpu_custom_call.1} parent=39 // pred_check
          %p1658 = pneg %p152
        $region62: #{tpu_custom_call.1} parent=39 // pred_check_branch
          %1660 = sbr.rel (%p1658) target = $region64
        $region63: #{tpu_custom_call.1} parent=39 // pred_region
          %s1661 = smul.u32 2, %s24
          %s1663 = ssub.s32 256, 256
          %1664 = vsyncadd %s1654, %s1663
          %s1665 = smul.addr %s1661, 128
          %s1666 = scalar_lea.hbm %s5, %s1665
          %s1667 = sshll.u32 %s1657, 4
          %s1668 = int_to_ptr.vmem [resolvable:$true] %s1667
          %1673 = dma.vmem_to_hbm [thread:$0]  %s1668, 256, %s1666, %s1654, 128, 128, 8
        $region64: #{tpu_custom_call.1} parent=39 // pred_fallthru
          _
      $region40: #{tpu_custom_call.1} parent=5 // pred_fallthru
        _
      %p1674 = scmp.le.s32.totalorder 2, %s19
      // Predicated region
      $region65: #{tpu_custom_call.1} parent=5 // pred_check
        %p1675 = pneg %p1674
      $region66: #{tpu_custom_call.1} parent=5 // pred_check_branch
        %1677 = sbr.rel (%p1675) target = $region68
      $region67: #{tpu_custom_call.1} parent=5 // pred_region
        %s1678 = ssub.s32 %s19, 2
        // Predicated region
        $region69: #{tpu_custom_call.1} parent=67 // pred_check
          %p1679 = pneg %p158
        $region70: #{tpu_custom_call.1} parent=67 // pred_check_branch
          %1681 = sbr.rel (%p1679) target = $region72
        $region71: #{tpu_custom_call.1} parent=67 // pred_region
          %s1682 = sand.u32 %s143, 1
          %s1683 = scalar_lea.sflag [#allocation4], %s1682
          %s1684 = sand.u32 %s143, 1
          %s1685 = smul.addr %s1684, 16
          %s1686 = scalar_lea.vmem [#allocation11], %s1685
          %1687 = dma.done %s1683, 256
        $region72: #{tpu_custom_call.1} parent=67 // pred_fallthru
          _
      $region68: #{tpu_custom_call.1} parent=5 // pred_fallthru
        _
    $region6: #{tpu_custom_call.1} parent=1 // loop_footer
      %s23 = sadd.s32 1, %s19
    $region7: #{tpu_custom_call.1} parent=1 // loop_footer_branch
      %18 = sbr.rel target = $region3
    $region8: #{tpu_custom_call.1} parent=1 // loop_exit
      _
    %1688 = vsyncpa [#allocation3], 1
    %s1689 = scalar_lea.sflag [#allocation3], 1
    %1690 = vsyncpa %s1689, 1
    %1691 = vsyncpa [#allocation6], 1
    %1692 = vsyncpa [#allocation9], 1
    %1693 = vsyncpa [#allocation4], 1
    %s1694 = scalar_lea.sflag [#allocation4], 1
    %1695 = vsyncpa %s1694, 1

</llo_original>
